<compile_context>
chip_gen: v5e
topology: v5e:2x2
jax: 0.10.0
libtpu: 0.0.40
codegen_flags: <defaults>
</compile_context>

<pallas_src>
import functools

import jax
import jax.numpy as jnp
from jax import lax
from jax.experimental import pallas as pl
from jax.experimental.pallas import tpu as pltpu


def _round_up(v, m):
    return ((v + m - 1) // m) * m


# Sentinel coordinate for padded points (dist ~3e16 never wins a min vs. real points;
# the final row/col sums are additionally masked, so padded-vs-padded pairs never count).
_PAD_COORD = 1.0e8


# Acceptable Euler-angle ranges per joint: (21, 3, 2) = (joint, axis, [min, max])
PHYS_TARGETS = jnp.array(
    [[[-1.57, 1.57], [-1.57, 1.57], [-1.57, 1.57]],
     [[-1.05, 1.05], [0, 0], [-0.79, 0.26]],
     [[-0.52, 0.52], [0, 0], [-0.35, 0.79]],
     [[-0.26, 0.26], [0, 0], [0, 0]],
     [[-1.05, 0], [0, 0], [0, 0]],
     [[0, 0], [0, 0], [0, 0]],
     [[-1.05, 0.26], [0, 0], [-0.52, 0.26]],
     [[-0.52, 0], [0, 0], [0, 0]],
     [[-0.52, 0], [0, 0], [0, 0]],
     [[0, 0], [0, 0], [0, 0]],
     [[-1.05, 0.26], [0, 0], [-0.52, 0.26]],
     [[-0.52, 0], [0, 0], [0, 0]],
     [[-0.52, 0], [0, 0], [0, 0]],
     [[0, 0], [0, 0], [0, 0]],
     [[-1.05, 0.26], [0, 0], [-0.52, 0.26]],
     [[-0.52, 0], [0, 0], [0, 0]],
     [[-0.52, 0], [0, 0], [0, 0]],
     [[0, 0], [0, 0], [0, 0]],
     [[-1.05, 0.26], [0, 0], [-0.52, 0.26]],
     [[-0.52, 0], [0, 0], [0, 0]],
     [[-0.52, 0], [0, 0], [0, 0]]], dtype=jnp.float32)


def q_to_euler(q):
    # TODO(synk): original q_to_euler is not in the provided source; this is the
    # standard (w, x, y, z) quaternion -> intrinsic XYZ euler conversion.  Kept in
    # plain JAX (tiny: B*J quats) because Mosaic has no guaranteed arcsin/arctan2.
    n = jnp.sqrt(jnp.sum(q * q, axis=-1, keepdims=True)) + 1e-8
    qn = q / n
    w, x, y, z = qn[..., 0], qn[..., 1], qn[..., 2], qn[..., 3]
    roll = jnp.arctan2(2.0 * (w * x + y * z), 1.0 - 2.0 * (x * x + y * y))
    pitch = jnp.arcsin(jnp.clip(2.0 * (w * y - z * x), -1.0, 1.0))
    yaw = jnp.arctan2(2.0 * (w * z + x * y), 1.0 - 2.0 * (y * y + z * z))
    return jnp.stack([roll, pitch, yaw], axis=-1)


# ---------------------------------------------------------------------------
# Fused kernel: tiled chamfer distance + coord MSE + physical hinge loss
# ---------------------------------------------------------------------------
def _full_loss_kernel(pt_ref, qt_ref, cp_ref, cg_ref, e_ref, lo_ref, hi_ref,
                      o1_ref, o2_ref, mse_ref, phys_ref,
                      psq_ref, qsq_ref, d1min_ref, d2min_ref,
                      *, tn, tm, n_valid, m_valid, n_padded, m_padded,
                      inv_mse, inv_phys):
    n = pl.program_id(1)
    m = pl.program_id(2)
    n_last = pl.num_programs(1) - 1
    m_last = pl.num_programs(2) - 1

    pt = pt_ref[0]                                    # (3, tn) f32, lane-dense
    qt = qt_ref[0]                                    # (3, tm) f32, lane-dense

    # ---- first (n, m) step for this batch block: tiny fused losses + accum init ----
    @pl.when(jnp.logical_and(n == 0, m == 0))
    def _():
        d = cp_ref[...] - cg_ref[...]                 # (3, Nc)
        mse_ref[...] = jnp.broadcast_to(jnp.sum(d * d) * inv_mse, mse_ref.shape)
        e = e_ref[...]                                # (3, B*J) euler angles
        hinge = jnp.maximum(lo_ref[...] - e, 0.0) + jnp.maximum(e - hi_ref[...], 0.0)
        phys_ref[...] = jnp.broadcast_to(jnp.sum(hinge) * inv_phys, phys_ref.shape)
        o1_ref[...] = jnp.zeros_like(o1_ref)
        o2_ref[...] = jnp.zeros_like(o2_ref)

    # ---- |p|^2, lane-broadcast (tn, 128): computed ONCE per n tile ----
    @pl.when(m == 0)
    def _():
        ones = jnp.ones((3, 128), jnp.float32)
        psq_ref[...] = lax.dot_general(pt * pt, ones, (((0,), (0,)), ((), ())),
                                       preferred_element_type=jnp.float32)

    m_off = pl.multiple_of(m * tm, 128)

    # ---- |q|^2 row (1, tm): computed ONCE per m slot ----
    @pl.when(n == 0)
    def _():
        qsq_ref[:, pl.ds(m_off, tm)] = jnp.sum(qt * qt, axis=0, keepdims=True)

    # ---- pairwise squared distances via the MXU identity |p|^2 + |q|^2 - 2 p.q ----
    pq = lax.dot_general(pt, qt, (((0,), (0,)), ((), ())),
                         preferred_element_type=jnp.float32)      # (tn, tm)
    psq = psq_ref[...]                                            # (tn, 128)
    qsq = qsq_ref[:, pl.ds(m_off, tm)]                            # (1, tm)

    # dist / row-partial-min / col-partial-min back-to-back per 128-lane group:
    # keeps everything VPU-only in the inner loop (no per-step cross-lane XLU reduce,
    # no (tn,1) lane-sparse values, no full-dist round trip).
    n_groups = tm // 128
    row_min = None
    col_mins = []
    for g in range(n_groups):                         # static loop over lane groups
        c0 = g * 128
        dg = (qsq[:, c0:c0 + 128] - 2.0 * pq[:, c0:c0 + 128]) + psq   # (tn, 128)
        row_min = dg if row_min is None else jnp.minimum(row_min, dg)
        col_mins.append(jnp.min(dg, axis=0, keepdims=True))           # (1, 128)
    col_min = col_mins[0] if n_groups == 1 else jnp.concatenate(col_mins, axis=1)

    # ---- d1: lane-blocked running min over the m (target) axis ----
    @pl.when(m == 0)
    def _():
        d1min_ref[...] = row_min

    @pl.when(m != 0)
    def _():
        d1min_ref[...] = jnp.minimum(d1min_ref[...], row_min)

    # ---- d2: running col min over the n (source) axis, one lane slot per target ----
    @pl.when(n == 0)
    def _():
        d2min_ref[:, pl.ds(m_off, tm)] = col_min

    @pl.when(n != 0)
    def _():
        d2min_ref[:, pl.ds(m_off, tm)] = jnp.minimum(
            d2min_ref[:, pl.ds(m_off, tm)], col_min)

    # ---- finalize d1 for this n tile: ONE cross-lane XLU reduce + masked sum ----
    @pl.when(m == m_last)
    def _():
        d1 = jnp.min(d1min_ref[...], axis=1, keepdims=True)       # (tn, 1)
        d1 = jnp.maximum(d1, 0.0)                                 # clamp f32 cancellation
        if n_padded:  # static: only emit the mask when padding exists
            rows = lax.broadcasted_iota(jnp.int32, (tn, 1), 0) + n * tn
            d1 = jnp.where(rows < n_valid, d1, 0.0)
        o1_ref[...] = o1_ref[...] + jnp.sum(d1)

    # ---- finalize d2 for this m slot: clamp + masked sum ----
    @pl.when(n == n_last)
    def _():
        d2 = jnp.maximum(d2min_ref[:, pl.ds(m_off, tm)], 0.0)     # (1, tm)
        if m_padded:
            cols = lax.broadcasted_iota(jnp.int32, (1, tm), 1) + m * tm
            d2 = jnp.where(cols < m_valid, d2, 0.0)
        o2_ref[...] = o2_ref[...] + jnp.sum(d2)


def _pick_tiles(N, M, tile_n=None, tile_m=None):
    """Generation-conditional tile sizes.

    v7x (64 MiB VMEM): keep the (tn, tm) dist tile + double-buffered inputs + pipeline
    temps small (tn=512, tm=1024, limit 48 MiB).  v5e/v6e (128 MiB): double the tiles
    to cut serial grid-step overhead and raise the scoped-VMEM limit.
    """
    tn_cap, tm_cap, vmem_limit = 512, 1024, 48 * 1024 * 1024        # v7x-safe default
    try:
        vmem_bytes = pltpu.get_tpu_info().vmem_capacity_bytes
        if vmem_bytes >= 100 * 1024 * 1024:                          # v5e / v6e: 128 MiB
            tn_cap, tm_cap, vmem_limit = 1024, 2048, 96 * 1024 * 1024
    except Exception:
        pass  # unknown generation -> conservative defaults
    tn = min(tile_n or tn_cap, _round_up(N, 128))
    tm = min(tile_m or tm_cap, _round_up(M, 128))
    return tn, tm, vmem_limit


def full_loss_pallas(pc_pred, pc_gt, coords_pred, coords_gt, quats,
                     *, tile_n=None, tile_m=None):
    """Returns (coord_loss, chamfer_loss, p_loss) with one fused pallas_call."""
    B, N, _ = pc_pred.shape
    Bq, M, _ = pc_gt.shape
    assert Bq == B, "point-cloud batch mismatch"
    tn, tm, vmem_limit = _pick_tiles(N, M, tile_n, tile_m)
    n_pad = _round_up(N, tn)
    m_pad = _round_up(M, tm)

    # Lane-dense layout: (B, 3, N) / (B, 3, M); pad points with a far sentinel so the
    # per-tile mins never pick a padded point (only the final sums need masking).
    pt = jnp.transpose(pc_pred.astype(jnp.float32), (0, 2, 1))
    qt = jnp.transpose(pc_gt.astype(jnp.float32), (0, 2, 1))
    if n_pad != N:
        pt = jnp.pad(pt, ((0, 0), (0, 0), (0, n_pad - N)), constant_values=_PAD_COORD)
    if m_pad != M:
        qt = jnp.pad(qt, ((0, 0), (0, 0), (0, m_pad - M)), constant_values=_PAD_COORD)

    # Tiny coord / physical-loss inputs, lane-dense (3, K).
    cp = coords_pred.astype(jnp.float32).reshape(-1, 3).T        # (3, Nc)
    cg = coords_gt.astype(jnp.float32).reshape(-1, 3).T          # (3, Nc)
    Bj, J, _ = quats.shape
    euler = q_to_euler(quats.astype(jnp.float32))                # (Bj, J, 3)
    et = euler.reshape(Bj * J, 3).T                              # (3, Bj*J)
    lo = jnp.tile(PHYS_TARGETS[:, :, 0].T, (1, Bj))              # (3, Bj*J)
    hi = jnp.tile(PHYS_TARGETS[:, :, 1].T, (1, Bj))              # (3, Bj*J)

    n_tiles = n_pad // tn
    m_tiles = m_pad // tm

    kernel = functools.partial(
        _full_loss_kernel, tn=tn, tm=tm, n_valid=N, m_valid=M,
        n_padded=(n_pad != N), m_padded=(m_pad != M),
        inv_mse=1.0 / float(coords_pred.size),                   # mean over all elements
        inv_phys=1.0 / float(Bj * J))                            # sum / (B * J) == reference

    def _full2d(shape):
        return pl.BlockSpec(shape, lambda b, n, m: (0, 0))

    acc_spec = pl.BlockSpec((1, 1, 128), lambda b, n, m: (b, 0, 0))
    acc_shape = jax.ShapeDtypeStruct((B, 1, 128), jnp.float32)

    s1, s2, mse, phys = pl.pallas_call(
        kernel,
        out_shape=(acc_shape, acc_shape, acc_shape, acc_shape),
        grid=(B, n_tiles, m_tiles),
        in_specs=[pl.BlockSpec((1, 3, tn), lambda b, n, m: (b, 0, n)),
                  pl.BlockSpec((1, 3, tm), lambda b, n, m: (b, 0, m)),
                  _full2d(cp.shape), _full2d(cg.shape),
                  _full2d(et.shape), _full2d(lo.shape), _full2d(hi.shape)],
        out_specs=(acc_spec, acc_spec, acc_spec, acc_spec),
        scratch_shapes=[pltpu.VMEM((tn, 128), jnp.float32),        # cached |p|^2 (per n)
                        pltpu.VMEM((1, m_pad), jnp.float32),       # cached |q|^2 (per m)
                        pltpu.VMEM((tn, 128), jnp.float32),        # lane-blocked row mins
                        pltpu.VMEM((1, m_pad), jnp.float32)],      # running col mins
        compiler_params=pltpu.CompilerParams(
            dimension_semantics=("parallel", "arbitrary", "arbitrary"),
            vmem_limit_bytes=vmem_limit),
    )(pt, qt, cp, cg, et, lo, hi)

    sum1 = jnp.sum(s1[:, 0, 0])   # sum_b sum_i min_j ||p_i - q_j||^2
    sum2 = jnp.sum(s2[:, 0, 0])   # sum_b sum_j min_i ||p_i - q_j||^2
    # Reference computes (dist1 + dist2).mean(), which requires N == M; this is the
    # equivalent mean(dist1) + mean(dist2) form (identical when N == M).
    chamfer = sum1 / (B * N) + sum2 / (B * M)
    return mse[0, 0, 0], chamfer, phys[0, 0, 0]


# ---------------------------------------------------------------------------
# FullLoss module equivalent
# ---------------------------------------------------------------------------
class FullLoss:
    def __init__(self, chamfer_lambda=0.1, physical_lambda=0.1):
        # NOTE: matching the reference full_loss, the lambdas are stored but the
        # returned `loss` is coord_loss only (the reference never applies them).
        self.chamfer_lambda = chamfer_lambda
        self.physical_lambda = physical_lambda

    def __call__(self, preds, targets, has_anno=None, joint_idxs=None):
        coords_pred = preds[2]
        if has_anno is not None:
            coords_pred = coords_pred[has_anno]
        if joint_idxs is not None:
            coords_pred = coords_pred[:, joint_idxs]
        coord_loss, chamfer_loss, p_loss = full_loss_pallas(
            preds[0], targets[1], coords_pred, targets[0], preds[6])
        loss = coord_loss
        return loss, coord_loss, chamfer_loss, p_loss


if __name__ == "__main__":
    key = jax.random.PRNGKey(0)
    k1, k2, k3, k4, k5 = jax.random.split(key, 5)

    B, N, J = 2, 64, 21
    pc_pred = jax.random.normal(k1, (B, N, 3), jnp.float32)       # preds[0]
    coords_pred = jax.random.normal(k2, (B, J, 3), jnp.float32)   # preds[2]
    quats = jax.random.normal(k3, (B, J, 4), jnp.float32)         # preds[6]
    coords_gt = jax.random.normal(k4, (B, J, 3), jnp.float32)     # targets[0]
    pc_gt = jax.random.normal(k5, (B, N, 3), jnp.float32)         # targets[1]

    preds = (pc_pred, None, coords_pred, None, None, None, quats)
    targets = (coords_gt, pc_gt)

    loss_fn = FullLoss(chamfer_lambda=0.1, physical_lambda=0.1)
    loss, coord_loss, chamfer_loss, p_loss = loss_fn(preds, targets)
    jax.block_until_ready((loss, coord_loss, chamfer_loss, p_loss))
    print("KERNEL_OK")
</pallas_src>

<mosaic_0001>
module attributes {stable_mosaic.version = 11 : i64} {
  func.func @_full_loss_kernel(%arg0: i32, %arg1: i32, %arg2: i32, %arg3: memref<1x3x128xf32, #tpu.memory_space<vmem>>, %arg4: memref<1x3x128xf32, #tpu.memory_space<vmem>>, %arg5: memref<3x42xf32, #tpu.memory_space<vmem>>, %arg6: memref<3x42xf32, #tpu.memory_space<vmem>>, %arg7: memref<3x42xf32, #tpu.memory_space<vmem>>, %arg8: memref<3x42xf32, #tpu.memory_space<vmem>>, %arg9: memref<3x42xf32, #tpu.memory_space<vmem>>, %arg10: memref<1x1x128xf32, #tpu.memory_space<vmem>>, %arg11: memref<1x1x128xf32, #tpu.memory_space<vmem>>, %arg12: memref<1x1x128xf32, #tpu.memory_space<vmem>>, %arg13: memref<1x1x128xf32, #tpu.memory_space<vmem>>, %arg14: memref<128x128xf32, #tpu.memory_space<vmem>>, %arg15: memref<1x128xf32, #tpu.memory_space<vmem>>, %arg16: memref<128x128xf32, #tpu.memory_space<vmem>>, %arg17: memref<1x128xf32, #tpu.memory_space<vmem>>) attributes {dimension_semantics = [#tpu.dimension_semantics<parallel>, #tpu.dimension_semantics<arbitrary>, #tpu.dimension_semantics<arbitrary>], iteration_bounds = array<i64: 2, 1, 1>, scalar_prefetch = 0 : i64, scratch_operands = 4 : i64, tpu.core_type = #tpu.core_type<tc>, window_params = [{transform_indices = @transform_0, window_bounds = array<i64: 1, 3, 128>}, {transform_indices = @transform_1, window_bounds = array<i64: 1, 3, 128>}, {pipeline_mode = #tpu.pipeline_mode<synchronous>, transform_indices = @transform_2, window_bounds = array<i64: 3, 42>}, {pipeline_mode = #tpu.pipeline_mode<synchronous>, transform_indices = @transform_3, window_bounds = array<i64: 3, 42>}, {pipeline_mode = #tpu.pipeline_mode<synchronous>, transform_indices = @transform_4, window_bounds = array<i64: 3, 42>}, {pipeline_mode = #tpu.pipeline_mode<synchronous>, transform_indices = @transform_5, window_bounds = array<i64: 3, 42>}, {pipeline_mode = #tpu.pipeline_mode<synchronous>, transform_indices = @transform_6, window_bounds = array<i64: 3, 42>}, {transform_indices = @transform_7, window_bounds = array<i64: 1, 1, 128>}, {transform_indices = @transform_8, window_bounds = array<i64: 1, 1, 128>}, {transform_indices = @transform_9, window_bounds = array<i64: 1, 1, 128>}, {transform_indices = @transform_10, window_bounds = array<i64: 1, 1, 128>}]} {
    %c0 = arith.constant 0 : index
    %c0_0 = arith.constant 0 : index
    %c0_1 = arith.constant 0 : index
    %0 = vector.load %arg3[%c0, %c0_0, %c0_1] : memref<1x3x128xf32, #tpu.memory_space<vmem>>, vector<1x3x128xf32>
    %1 = vector.shape_cast %0 : vector<1x3x128xf32> to vector<3x128xf32>
    %c0_2 = arith.constant 0 : index
    %c0_3 = arith.constant 0 : index
    %c0_4 = arith.constant 0 : index
    %2 = vector.load %arg4[%c0_2, %c0_3, %c0_4] : memref<1x3x128xf32, #tpu.memory_space<vmem>>, vector<1x3x128xf32>
    %3 = vector.shape_cast %2 : vector<1x3x128xf32> to vector<3x128xf32>
    %c0_i32 = arith.constant 0 : i32
    %4 = arith.cmpi eq, %arg1, %c0_i32 : i32
    %c0_i32_5 = arith.constant 0 : i32
    %5 = arith.cmpi eq, %arg2, %c0_i32_5 : i32
    %6 = arith.andi %4, %5 : i1
    %7 = arith.extui %6 : i1 to i32
    %c0_i32_6 = arith.constant 0 : i32
    %8 = arith.cmpi ne, %7, %c0_i32_6 : i32
    scf.if %8 {
      %c0_28 = arith.constant 0 : index
      %c0_29 = arith.constant 0 : index
      %46 = vector.load %arg5[%c0_28, %c0_29] : memref<3x42xf32, #tpu.memory_space<vmem>>, vector<3x42xf32>
      %c0_30 = arith.constant 0 : index
      %c0_31 = arith.constant 0 : index
      %47 = vector.load %arg6[%c0_30, %c0_31] : memref<3x42xf32, #tpu.memory_space<vmem>>, vector<3x42xf32>
      %48 = arith.subf %46, %47 : vector<3x42xf32>
      %49 = arith.mulf %48, %48 : vector<3x42xf32>
      %50 = vector.shape_cast %49 : vector<3x42xf32> to vector<1x3x42xf32>
      %cst_32 = arith.constant dense<0.000000e+00> : vector<1xf32>
      %51 = vector.multi_reduction <add>, %50, %cst_32 [1, 2] : vector<1x3x42xf32> to vector<1xf32>
      %52 = vector.shape_cast %51 : vector<1xf32> to vector<1x1x1xf32>
      %53 = vector.extract %52[0, 0, 0] : f32 from vector<1x1x1xf32>
      %cst_33 = arith.constant 0.00793650839 : f32
      %54 = arith.mulf %53, %cst_33 : f32
      %55 = vector.broadcast %54 : f32 to vector<1x1x128xf32>
      %c0_34 = arith.constant 0 : index
      %c0_35 = arith.constant 0 : index
      %c0_36 = arith.constant 0 : index
      %56 = vector.load %arg12[%c0_34, %c0_35, %c0_36] : memref<1x1x128xf32, #tpu.memory_space<vmem>>, vector<1x1x128xf32>
      tpu.vector_store %arg12[%c0_34, %c0_35, %c0_36], %55 {strides = array<i32>} : memref<1x1x128xf32, #tpu.memory_space<vmem>>, vector<1x1x128xf32>,
      %c0_37 = arith.constant 0 : index
      %c0_38 = arith.constant 0 : index
      %57 = vector.load %arg7[%c0_37, %c0_38] : memref<3x42xf32, #tpu.memory_space<vmem>>, vector<3x42xf32>
      %c0_39 = arith.constant 0 : index
      %c0_40 = arith.constant 0 : index
      %58 = vector.load %arg8[%c0_39, %c0_40] : memref<3x42xf32, #tpu.memory_space<vmem>>, vector<3x42xf32>
      %59 = arith.subf %58, %57 : vector<3x42xf32>
      %cst_41 = arith.constant 0.000000e+00 : f32
      %60 = vector.broadcast %cst_41 : f32 to vector<3x42xf32>
      %61 = arith.maximumf %59, %60 : vector<3x42xf32>
      %c0_42 = arith.constant 0 : index
      %c0_43 = arith.constant 0 : index
      %62 = vector.load %arg9[%c0_42, %c0_43] : memref<3x42xf32, #tpu.memory_space<vmem>>, vector<3x42xf32>
      %63 = arith.subf %57, %62 : vector<3x42xf32>
      %cst_44 = arith.constant 0.000000e+00 : f32
      %64 = vector.broadcast %cst_44 : f32 to vector<3x42xf32>
      %65 = arith.maximumf %63, %64 : vector<3x42xf32>
      %66 = arith.addf %61, %65 : vector<3x42xf32>
      %67 = vector.shape_cast %66 : vector<3x42xf32> to vector<1x3x42xf32>
      %cst_45 = arith.constant dense<0.000000e+00> : vector<1xf32>
      %68 = vector.multi_reduction <add>, %67, %cst_45 [1, 2] : vector<1x3x42xf32> to vector<1xf32>
      %69 = vector.shape_cast %68 : vector<1xf32> to vector<1x1x1xf32>
      %70 = vector.extract %69[0, 0, 0] : f32 from vector<1x1x1xf32>
      %cst_46 = arith.constant 0.0238095243 : f32
      %71 = arith.mulf %70, %cst_46 : f32
      %72 = vector.broadcast %71 : f32 to vector<1x1x128xf32>
      %c0_47 = arith.constant 0 : index
      %c0_48 = arith.constant 0 : index
      %c0_49 = arith.constant 0 : index
      %73 = vector.load %arg13[%c0_47, %c0_48, %c0_49] : memref<1x1x128xf32, #tpu.memory_space<vmem>>, vector<1x1x128xf32>
      tpu.vector_store %arg13[%c0_47, %c0_48, %c0_49], %72 {strides = array<i32>} : memref<1x1x128xf32, #tpu.memory_space<vmem>>, vector<1x1x128xf32>,
      %cst_50 = arith.constant 0.000000e+00 : f32
      %74 = vector.broadcast %cst_50 : f32 to vector<1x1x128xf32>
      %c0_51 = arith.constant 0 : index
      %c0_52 = arith.constant 0 : index
      %c0_53 = arith.constant 0 : index
      %75 = vector.load %arg10[%c0_51, %c0_52, %c0_53] : memref<1x1x128xf32, #tpu.memory_space<vmem>>, vector<1x1x128xf32>
      tpu.vector_store %arg10[%c0_51, %c0_52, %c0_53], %74 {strides = array<i32>} : memref<1x1x128xf32, #tpu.memory_space<vmem>>, vector<1x1x128xf32>,
      %cst_54 = arith.constant 0.000000e+00 : f32
      %76 = vector.broadcast %cst_54 : f32 to vector<1x1x128xf32>
      %c0_55 = arith.constant 0 : index
      %c0_56 = arith.constant 0 : index
      %c0_57 = arith.constant 0 : index
      %77 = vector.load %arg11[%c0_55, %c0_56, %c0_57] : memref<1x1x128xf32, #tpu.memory_space<vmem>>, vector<1x1x128xf32>
      tpu.vector_store %arg11[%c0_55, %c0_56, %c0_57], %76 {strides = array<i32>} : memref<1x1x128xf32, #tpu.memory_space<vmem>>, vector<1x1x128xf32>,
    } else {
    }
    %c0_i32_7 = arith.constant 0 : i32
    %9 = arith.cmpi eq, %arg2, %c0_i32_7 : i32
    %10 = arith.extui %9 : i1 to i32
    %c0_i32_8 = arith.constant 0 : i32
    %11 = arith.cmpi ne, %10, %c0_i32_8 : i32
    scf.if %11 {
      %cst_28 = arith.constant 1.000000e+00 : f32
      %46 = vector.broadcast %cst_28 : f32 to vector<3x128xf32>
      %47 = arith.mulf %1, %1 : vector<3x128xf32>
      %cst_29 = arith.constant dense<0.000000e+00> : vector<128x128xf32>
      %48 = tpu.matmul %47, %46, %cst_29 {dimension_numbers = #tpu.dot_dimension_numbers<[0], [0], [1], [1], [0, 1, 1, 1], [], []>} : vector<3x128xf32>, vector<3x128xf32>, vector<128x128xf32> -> vector<128x128xf32>
      %c0_30 = arith.constant 0 : index
      %c0_31 = arith.constant 0 : index
      %49 = vector.load %arg14[%c0_30, %c0_31] : memref<128x128xf32, #tpu.memory_space<vmem>>, vector<128x128xf32>
      tpu.vector_store %arg14[%c0_30, %c0_31], %48 {strides = array<i32>} : memref<128x128xf32, #tpu.memory_space<vmem>>, vector<128x128xf32>,
    } else {
    }
    %c128_i32 = arith.constant 128 : i32
    %12 = arith.muli %arg2, %c128_i32 : i32
    %13 = tpu.assume_multiple %12, 128 : i32
    %c0_i32_9 = arith.constant 0 : i32
    %14 = arith.cmpi eq, %arg1, %c0_i32_9 : i32
    %15 = arith.extui %14 : i1 to i32
    %c0_i32_10 = arith.constant 0 : i32
    %16 = arith.cmpi ne, %15, %c0_i32_10 : i32
    scf.if %16 {
      %46 = arith.mulf %3, %3 : vector<3x128xf32>
      %cst_28 = arith.constant dense<0.000000e+00> : vector<128xf32>
      %47 = vector.multi_reduction <add>, %46, %cst_28 [0] : vector<3x128xf32> to vector<128xf32>
      %48 = vector.shape_cast %47 : vector<128xf32> to vector<1x128xf32>
      %c0_29 = arith.constant 0 : index
      %49 = arith.index_cast %13 : i32 to index
      %50 = vector.load %arg15[%c0_29, %49] : memref<1x128xf32, #tpu.memory_space<vmem>>, vector<1x128xf32>
      tpu.vector_store %arg15[%c0_29, %49], %48 {strides = array<i32>} : memref<1x128xf32, #tpu.memory_space<vmem>>, vector<1x128xf32>,
    } else {
    }
    %cst = arith.constant dense<0.000000e+00> : vector<128x128xf32>
    %17 = tpu.matmul %1, %3, %cst {dimension_numbers = #tpu.dot_dimension_numbers<[0], [0], [1], [1], [0, 1, 1, 1], [], []>} : vector<3x128xf32>, vector<3x128xf32>, vector<128x128xf32> -> vector<128x128xf32>
    %c0_11 = arith.constant 0 : index
    %c0_12 = arith.constant 0 : index
    %18 = vector.load %arg14[%c0_11, %c0_12] : memref<128x128xf32, #tpu.memory_space<vmem>>, vector<128x128xf32>
    %c0_13 = arith.constant 0 : index
    %19 = arith.index_cast %13 : i32 to index
    %20 = vector.load %arg15[%c0_13, %19] : memref<1x128xf32, #tpu.memory_space<vmem>>, vector<1x128xf32>
    %cst_14 = arith.constant 2.000000e+00 : f32
    %21 = vector.broadcast %cst_14 : f32 to vector<128x128xf32>
    %22 = arith.mulf %21, %17 : vector<128x128xf32>
    %23 = vector.broadcast %20 : vector<1x128xf32> to vector<128x128xf32>
    %24 = arith.subf %23, %22 : vector<128x128xf32>
    %25 = arith.addf %24, %18 : vector<128x128xf32>
    %cst_15 = arith.constant dense<0x7F800000> : vector<128xf32>
    %26 = vector.multi_reduction <minimumf>, %25, %cst_15 [0] : vector<128x128xf32> to vector<128xf32>
    %27 = vector.shape_cast %26 : vector<128xf32> to vector<1x128xf32>
    %c0_i32_16 = arith.constant 0 : i32
    %28 = arith.cmpi eq, %arg2, %c0_i32_16 : i32
    %29 = arith.extui %28 : i1 to i32
    %c0_i32_17 = arith.constant 0 : i32
    %30 = arith.cmpi ne, %29, %c0_i32_17 : i32
    scf.if %30 {
      %c0_28 = arith.constant 0 : index
      %c0_29 = arith.constant 0 : index
      %46 = vector.load %arg16[%c0_28, %c0_29] : memref<128x128xf32, #tpu.memory_space<vmem>>, vector<128x128xf32>
      tpu.vector_store %arg16[%c0_28, %c0_29], %25 {strides = array<i32>} : memref<128x128xf32, #tpu.memory_space<vmem>>, vector<128x128xf32>,
    } else {
    }
    %c0_i32_18 = arith.constant 0 : i32
    %31 = arith.cmpi ne, %arg2, %c0_i32_18 : i32
    %32 = arith.extui %31 : i1 to i32
    %c0_i32_19 = arith.constant 0 : i32
    %33 = arith.cmpi ne, %32, %c0_i32_19 : i32
    scf.if %33 {
      %c0_28 = arith.constant 0 : index
      %c0_29 = arith.constant 0 : index
      %46 = vector.load %arg16[%c0_28, %c0_29] : memref<128x128xf32, #tpu.memory_space<vmem>>, vector<128x128xf32>
      %47 = arith.minimumf %46, %25 : vector<128x128xf32>
      %c0_30 = arith.constant 0 : index
      %c0_31 = arith.constant 0 : index
      %48 = vector.load %arg16[%c0_30, %c0_31] : memref<128x128xf32, #tpu.memory_space<vmem>>, vector<128x128xf32>
      tpu.vector_store %arg16[%c0_30, %c0_31], %47 {strides = array<i32>} : memref<128x128xf32, #tpu.memory_space<vmem>>, vector<128x128xf32>,
    } else {
    }
    %c0_i32_20 = arith.constant 0 : i32
    %34 = arith.cmpi eq, %arg1, %c0_i32_20 : i32
    %35 = arith.extui %34 : i1 to i32
    %c0_i32_21 = arith.constant 0 : i32
    %36 = arith.cmpi ne, %35, %c0_i32_21 : i32
    scf.if %36 {
      %c0_28 = arith.constant 0 : index
      %46 = arith.index_cast %13 : i32 to index
      %47 = vector.load %arg17[%c0_28, %46] : memref<1x128xf32, #tpu.memory_space<vmem>>, vector<1x128xf32>
      tpu.vector_store %arg17[%c0_28, %46], %27 {strides = array<i32>} : memref<1x128xf32, #tpu.memory_space<vmem>>, vector<1x128xf32>,
    } else {
    }
    %c0_i32_22 = arith.constant 0 : i32
    %37 = arith.cmpi ne, %arg1, %c0_i32_22 : i32
    %38 = arith.extui %37 : i1 to i32
    %c0_i32_23 = arith.constant 0 : i32
    %39 = arith.cmpi ne, %38, %c0_i32_23 : i32
    scf.if %39 {
      %c0_28 = arith.constant 0 : index
      %46 = arith.index_cast %13 : i32 to index
      %47 = vector.load %arg17[%c0_28, %46] : memref<1x128xf32, #tpu.memory_space<vmem>>, vector<1x128xf32>
      %48 = arith.minimumf %47, %27 : vector<1x128xf32>
      %c0_29 = arith.constant 0 : index
      %49 = arith.index_cast %13 : i32 to index
      %50 = vector.load %arg17[%c0_29, %49] : memref<1x128xf32, #tpu.memory_space<vmem>>, vector<1x128xf32>
      tpu.vector_store %arg17[%c0_29, %49], %48 {strides = array<i32>} : memref<1x128xf32, #tpu.memory_space<vmem>>, vector<1x128xf32>,
    } else {
    }
    %c0_i32_24 = arith.constant 0 : i32
    %40 = arith.cmpi eq, %arg2, %c0_i32_24 : i32
    %41 = arith.extui %40 : i1 to i32
    %c0_i32_25 = arith.constant 0 : i32
    %42 = arith.cmpi ne, %41, %c0_i32_25 : i32
    scf.if %42 {
      %c0_28 = arith.constant 0 : index
      %c0_29 = arith.constant 0 : index
      %46 = vector.load %arg16[%c0_28, %c0_29] : memref<128x128xf32, #tpu.memory_space<vmem>>, vector<128x128xf32>
      %cst_30 = arith.constant dense<0x7F800000> : vector<128xf32>
      %47 = vector.multi_reduction <minimumf>, %46, %cst_30 [1] : vector<128x128xf32> to vector<128xf32>
      %48 = vector.shape_cast %47 : vector<128xf32> to vector<128x1xf32>
      %cst_31 = arith.constant 0.000000e+00 : f32
      %49 = vector.broadcast %cst_31 : f32 to vector<128x1xf32>
      %50 = arith.maximumf %48, %49 : vector<128x1xf32>
      %51 = tpu.iota {dimensions = array<i32: 0>} : vector<128x1xi32>
      %c128_i32_32 = arith.constant 128 : i32
      %52 = arith.muli %arg1, %c128_i32_32 : i32
      %53 = vector.broadcast %52 : i32 to vector<128x1xi32>
      %54 = arith.addi %51, %53 : vector<128x1xi32>
      %c64_i32 = arith.constant 64 : i32
      %55 = vector.broadcast %c64_i32 : i32 to vector<128x1xi32>
      %56 = arith.cmpi slt, %54, %55 : vector<128x1xi32>
      %cst_33 = arith.constant 0.000000e+00 : f32
      %57 = vector.broadcast %cst_33 : f32 to vector<128x1xf32>
      %58 = arith.select %56, %50, %57 : vector<128x1xi1>, vector<128x1xf32>
      %c0_34 = arith.constant 0 : index
      %c0_35 = arith.constant 0 : index
      %c0_36 = arith.constant 0 : index
      %59 = vector.load %arg10[%c0_34, %c0_35, %c0_36] : memref<1x1x128xf32, #tpu.memory_space<vmem>>, vector<1x1x128xf32>
      %60 = vector.shape_cast %58 : vector<128x1xf32> to vector<1x128x1xf32>
      %cst_37 = arith.constant dense<0.000000e+00> : vector<1xf32>
      %61 = vector.multi_reduction <add>, %60, %cst_37 [1, 2] : vector<1x128x1xf32> to vector<1xf32>
      %62 = vector.shape_cast %61 : vector<1xf32> to vector<1x1x1xf32>
      %63 = vector.extract %62[0, 0, 0] : f32 from vector<1x1x1xf32>
      %64 = vector.broadcast %63 : f32 to vector<1x1x128xf32>
      %65 = arith.addf %59, %64 : vector<1x1x128xf32>
      %c0_38 = arith.constant 0 : index
      %c0_39 = arith.constant 0 : index
      %c0_40 = arith.constant 0 : index
      %66 = vector.load %arg10[%c0_38, %c0_39, %c0_40] : memref<1x1x128xf32, #tpu.memory_space<vmem>>, vector<1x1x128xf32>
      tpu.vector_store %arg10[%c0_38, %c0_39, %c0_40], %65 {strides = array<i32>} : memref<1x1x128xf32, #tpu.memory_space<vmem>>, vector<1x1x128xf32>,
    } else {
    }
    %c0_i32_26 = arith.constant 0 : i32
    %43 = arith.cmpi eq, %arg1, %c0_i32_26 : i32
    %44 = arith.extui %43 : i1 to i32
    %c0_i32_27 = arith.constant 0 : i32
    %45 = arith.cmpi ne, %44, %c0_i32_27 : i32
    scf.if %45 {
      %c0_28 = arith.constant 0 : index
      %46 = arith.index_cast %13 : i32 to index
      %47 = vector.load %arg17[%c0_28, %46] : memref<1x128xf32, #tpu.memory_space<vmem>>, vector<1x128xf32>
      %cst_29 = arith.constant 0.000000e+00 : f32
      %48 = vector.broadcast %cst_29 : f32 to vector<1x128xf32>
      %49 = arith.maximumf %47, %48 : vector<1x128xf32>
      %50 = tpu.iota {dimensions = array<i32: 1>} : vector<1x128xi32>
      %c128_i32_30 = arith.constant 128 : i32
      %51 = arith.muli %arg2, %c128_i32_30 : i32
      %52 = vector.broadcast %51 : i32 to vector<1x128xi32>
      %53 = arith.addi %50, %52 : vector<1x128xi32>
      %c64_i32 = arith.constant 64 : i32
      %54 = vector.broadcast %c64_i32 : i32 to vector<1x128xi32>
      %55 = arith.cmpi slt, %53, %54 : vector<1x128xi32>
      %cst_31 = arith.constant 0.000000e+00 : f32
      %56 = vector.broadcast %cst_31 : f32 to vector<1x128xf32>
      %57 = arith.select %55, %49, %56 : vector<1x128xi1>, vector<1x128xf32>
      %c0_32 = arith.constant 0 : index
      %c0_33 = arith.constant 0 : index
      %c0_34 = arith.constant 0 : index
      %58 = vector.load %arg11[%c0_32, %c0_33, %c0_34] : memref<1x1x128xf32, #tpu.memory_space<vmem>>, vector<1x1x128xf32>
      %59 = vector.shape_cast %57 : vector<1x128xf32> to vector<1x1x128xf32>
      %cst_35 = arith.constant dense<0.000000e+00> : vector<1xf32>
      %60 = vector.multi_reduction <add>, %59, %cst_35 [1, 2] : vector<1x1x128xf32> to vector<1xf32>
      %61 = vector.shape_cast %60 : vector<1xf32> to vector<1x1x1xf32>
      %62 = vector.extract %61[0, 0, 0] : f32 from vector<1x1x1xf32>
      %63 = vector.broadcast %62 : f32 to vector<1x1x128xf32>
      %64 = arith.addf %58, %63 : vector<1x1x128xf32>
      %c0_36 = arith.constant 0 : index
      %c0_37 = arith.constant 0 : index
      %c0_38 = arith.constant 0 : index
      %65 = vector.load %arg11[%c0_36, %c0_37, %c0_38] : memref<1x1x128xf32, #tpu.memory_space<vmem>>, vector<1x1x128xf32>
      tpu.vector_store %arg11[%c0_36, %c0_37, %c0_38], %64 {strides = array<i32>} : memref<1x1x128xf32, #tpu.memory_space<vmem>>, vector<1x1x128xf32>,
    } else {
    }
    return
  }
  func.func @transform_0(%arg0: i32, %arg1: i32, %arg2: i32) -> (i32, i32, i32) {
    %c0_i32 = arith.constant 0 : i32
    %c0_i32_0 = arith.constant 0 : i32
    return %arg0, %c0_i32, %arg1 : i32, i32, i32
  }
  func.func @transform_1(%arg0: i32, %arg1: i32, %arg2: i32) -> (i32, i32, i32) {
    %c0_i32 = arith.constant 0 : i32
    %c0_i32_0 = arith.constant 0 : i32
    return %arg0, %c0_i32, %arg2 : i32, i32, i32
  }
  func.func @transform_2(%arg0: i32, %arg1: i32, %arg2: i32) -> (i32, i32) {
    %c0_i32 = arith.constant 0 : i32
    %c0_i32_0 = arith.constant 0 : i32
    %c0_i32_1 = arith.constant 0 : i32
    return %c0_i32, %c0_i32_0 : i32, i32
  }
  func.func @transform_3(%arg0: i32, %arg1: i32, %arg2: i32) -> (i32, i32) {
    %c0_i32 = arith.constant 0 : i32
    %c0_i32_0 = arith.constant 0 : i32
    %c0_i32_1 = arith.constant 0 : i32
    return %c0_i32, %c0_i32_0 : i32, i32
  }
  func.func @transform_4(%arg0: i32, %arg1: i32, %arg2: i32) -> (i32, i32) {
    %c0_i32 = arith.constant 0 : i32
    %c0_i32_0 = arith.constant 0 : i32
    %c0_i32_1 = arith.constant 0 : i32
    return %c0_i32, %c0_i32_0 : i32, i32
  }
  func.func @transform_5(%arg0: i32, %arg1: i32, %arg2: i32) -> (i32, i32) {
    %c0_i32 = arith.constant 0 : i32
    %c0_i32_0 = arith.constant 0 : i32
    %c0_i32_1 = arith.constant 0 : i32
    return %c0_i32, %c0_i32_0 : i32, i32
  }
  func.func @transform_6(%arg0: i32, %arg1: i32, %arg2: i32) -> (i32, i32) {
    %c0_i32 = arith.constant 0 : i32
    %c0_i32_0 = arith.constant 0 : i32
    %c0_i32_1 = arith.constant 0 : i32
    return %c0_i32, %c0_i32_0 : i32, i32
  }
  func.func @transform_7(%arg0: i32, %arg1: i32, %arg2: i32) -> (i32, i32, i32) {
    %c0_i32 = arith.constant 0 : i32
    %c0_i32_0 = arith.constant 0 : i32
    %c0_i32_1 = arith.constant 0 : i32
    return %arg0, %c0_i32, %c0_i32_0 : i32, i32, i32
  }
  func.func @transform_8(%arg0: i32, %arg1: i32, %arg2: i32) -> (i32, i32, i32) {
    %c0_i32 = arith.constant 0 : i32
    %c0_i32_0 = arith.constant 0 : i32
    %c0_i32_1 = arith.constant 0 : i32
    return %arg0, %c0_i32, %c0_i32_0 : i32, i32, i32
  }
  func.func @transform_9(%arg0: i32, %arg1: i32, %arg2: i32) -> (i32, i32, i32) {
    %c0_i32 = arith.constant 0 : i32
    %c0_i32_0 = arith.constant 0 : i32
    %c0_i32_1 = arith.constant 0 : i32
    return %arg0, %c0_i32, %c0_i32_0 : i32, i32, i32
  }
  func.func @transform_10(%arg0: i32, %arg1: i32, %arg2: i32) -> (i32, i32, i32) {
    %c0_i32 = arith.constant 0 : i32
    %c0_i32_0 = arith.constant 0 : i32
    %c0_i32_1 = arith.constant 0 : i32
    return %arg0, %c0_i32, %c0_i32_0 : i32, i32, i32
  }
}

</mosaic_0001>

<llo_original>
// kernel: tpu_custom_call.1
$region0: #{tpu_custom_call.1}
  #allocation0 [shape = 'u32[]', space=smem, size = 0x4, offset = 0x4, fixed_abs, tag = 'smem constant byte address 0x4 - core index']
  #allocation1 [shape = 'u32[72,128]{1,0:T(1,128)}', space=vmem, size = 0x9000, scoped, tag = 'internal scratch']
  #allocation2 [shape = 'f32[128,128]{1,0:T(8,128)}', space=vmem, size = 0x10000, scoped, tag = 'scratch operand']
  #allocation3 [shape = 'f32[1,128]{1,0:T(1,128)}', space=vmem, size = 0x200, scoped, tag = 'scratch operand']
  #allocation4 [shape = 'f32[128,128]{1,0:T(8,128)}', space=vmem, size = 0x10000, scoped, tag = 'scratch operand']
  #allocation5 [shape = 'f32[1,128]{1,0:T(1,128)}', space=vmem, size = 0x200, scoped, tag = 'scratch operand']
  %s0 = inlined_call_operand.vmem [shape: f32[2,3,128], index: 0, kind: input, shape index: {}]
  %s1 = inlined_call_operand.vmem [shape: f32[2,3,128], index: 1, kind: input, shape index: {}]
  %s2 = inlined_call_operand.vmem [shape: f32[3,42], index: 2, kind: input, shape index: {}]
  %s3 = inlined_call_operand.vmem [shape: f32[3,42], index: 3, kind: input, shape index: {}]
  %s4 = inlined_call_operand.vmem [shape: f32[3,42], index: 4, kind: input, shape index: {}]
  %s5 = inlined_call_operand.vmem [shape: f32[3,42], index: 5, kind: input, shape index: {}]
  %s6 = inlined_call_operand.vmem [shape: f32[3,42], index: 6, kind: input, shape index: {}]
  %s7 = inlined_call_operand.hbm [shape: f32[2,1,128], index: 7, kind: output, shape index: {0}]
  %s8 = inlined_call_operand.hbm [shape: f32[2,1,128], index: 8, kind: output, shape index: {1}]
  %s9 = inlined_call_operand.hbm [shape: f32[2,1,128], index: 9, kind: output, shape index: {2}]
  %s10 = inlined_call_operand.hbm [shape: f32[2,1,128], index: 10, kind: output, shape index: {3}]
  %11 = xla_tuple %s7, %s8, %s9, %s10
  %s12 = sld [smem:[#allocation0]]
  $region121: #{tpu_custom_call.1} parent=0
    _
  %s14 = ssub.s32 1, %s12
  %s15 = scalar_select 0, %s14, %s12
  $region1: #{tpu_custom_call.1} parent=0
    #allocation6 [shape = 'u8[1024]{0}', space=vmem, size = 0x400, scoped, tag = 'output window, operand 0']
    #allocation7 [shape = 's32[2]{0}', space=sflag, size = 0x8, scoped, tag = 'scoped memory for tpu_custom_call.1']
    #allocation8 [shape = 'u8[1024]{0}', space=vmem, size = 0x400, scoped, tag = 'output window, operand 1']
    #allocation9 [shape = 's32[2]{0}', space=sflag, size = 0x8, scoped, tag = 'scoped memory for tpu_custom_call.1']
    #allocation10 [shape = 'u8[1024]{0}', space=vmem, size = 0x400, scoped, tag = 'output window, operand 2']
    #allocation11 [shape = 'u8[1024]{0}', space=vmem, size = 0x400, scoped, tag = 'output window, operand 3']
    #allocation12 [shape = 's32[2]{0}', space=sflag, size = 0x8, scoped, tag = 'scoped memory for tpu_custom_call.1']
    %16 = vsyncpa [#allocation7], 0
    %s17 = scalar_lea.sflag [#allocation7], 1
    %18 = vsyncpa %s17, 0
    %19 = vsyncpa [#allocation9], 0
    %s20 = scalar_lea.sflag [#allocation9], 1
    %21 = vsyncpa %s20, 0
    %22 = vsyncpa [#allocation12], 0
    %s23 = scalar_lea.sflag [#allocation12], 1
    %24 = vsyncpa %s23, 0
    loop: start=0, step=1, limit=4
    $region2: #{tpu_custom_call.1} parent=1 // loop_pre_header
      _
    $region3: #{tpu_custom_call.1} parent=1 // loop_header
      %s26 = sphi 0, %s30
      %p27 = scmp.ge.s32.totalorder %s26, 4
      %s33 = sphi 0, %s52
      %s34 = sphi 0, %s48
      %s35 = sphi 0, %s44
      %s36 = sphi 0, %s33
      %s37 = sphi 0, %s34
      %s38 = sphi 0, %s35
      %s39 = sphi 0, %s36
      %s40 = sphi 0, %s37
      %s41 = sphi 0, %s38
      %s57 = sphi 0, %s59
      %s60 = sphi 0, %s57
      %s61 = sphi 0, %s60
      %s77 = sphi 0, %s61
      %s85 = sphi 0, %s87
      %s88 = sphi 0, %s85
      %s89 = sphi 0, %s88
      %s105 = sphi 0, %s89
      %s109 = sphi 0, %s109
      %s111 = sphi 0, %s109
      %s112 = sphi 0, %s111
      %s126 = sphi 0, %s112
      %s130 = sphi 0, %s130
      %s132 = sphi 0, %s130
      %s133 = sphi 0, %s132
      %s147 = sphi 0, %s133
      %s151 = sphi 0, %s151
      %s153 = sphi 0, %s151
      %s154 = sphi 0, %s153
      %s168 = sphi 0, %s154
      %s172 = sphi 0, %s172
      %s174 = sphi 0, %s172
      %s175 = sphi 0, %s174
      %s189 = sphi 0, %s175
      %s193 = sphi 0, %s193
      %s195 = sphi 0, %s193
      %s196 = sphi 0, %s195
      %s210 = sphi 0, %s196
      %s216 = sphi 0, %s218
      %s219 = sphi 0, %s216
      %s220 = sphi 0, %s219
      %s236 = sphi 0, %s220
      %s242 = sphi 0, %s244
      %s245 = sphi 0, %s242
      %s246 = sphi 0, %s245
      %s262 = sphi 0, %s246
      %s268 = sphi 0, %s270
      %s271 = sphi 0, %s268
      %s272 = sphi 0, %s271
      %s288 = sphi 0, %s272
      %s294 = sphi 0, %s296
      %s297 = sphi 0, %s294
      %s298 = sphi 0, %s297
      %s314 = sphi 0, %s298
    $region4: #{tpu_custom_call.1} parent=1 // loop_header_branch
      %29 = sbr.rel (%p27) target = $region8
    $region5: #{tpu_custom_call.1} parent=1 // loop_body
      %s31 = ssub.s32 %s26, 1
      %s32 = ssub.s32 %s26, 2
      %s42 = sadd.s32 1, %s35
      %p43 = scmp.ge.s32.totalorder %s42, 1
      %s44 = scalar_select %p43, 0, %s42
      %s45 = sadd.s32 1, %s34
      %s46 = scalar_select %p43, %s45, %s34
      %p47 = scmp.ge.s32.totalorder %s46, 1
      %s48 = scalar_select %p47, 0, %s46
      %s49 = sadd.s32 1, %s33
      %s50 = scalar_select %p47, %s49, %s33
      %p51 = scmp.ge.s32.totalorder %s50, 2
      %s52 = scalar_select %p51, 0, %s50
      %s53 = ssub.s32 %s33, %s52
      %s54 = ssub.s32 %s34, %s48
      %s55 = sor.u32 %s53, %s54
      %p56 = scmp.eq.s32.totalorder %s55, 0
      %s58 = sadd.s32 %s57, 1
      %s59 = scalar_select %p56, %s57, %s58
      %p62 = pneg %p56
      %p63 = scmp.eq.s32.totalorder %s26, 1
      %p64 = por %p62, %p63
      %p65 = scmp.ne.s32.totalorder %s57, %s60
      %p66 = scmp.eq.s32.totalorder %s26, 0
      %p67 = por %p65, %p66
      %p68 = scmp.ne.s32.totalorder %s57, %s60
      %p69 = scmp.eq.s32.totalorder %s31, 1
      %p70 = por %p68, %p69
      %p71 = scmp.ne.s32.totalorder %s60, %s61
      %p72 = scmp.eq.s32.totalorder %s31, 0
      %p73 = por %p71, %p72
      %p74 = scmp.ne.s32.totalorder %s60, %s61
      %p75 = scmp.eq.s32.totalorder %s32, 1
      %p76 = por %p74, %p75
      %p78 = scmp.ne.s32.totalorder %s61, %s77
      %p79 = scmp.eq.s32.totalorder %s32, 0
      %p80 = por %p78, %p79
      %s81 = ssub.s32 %s33, %s52
      %s82 = ssub.s32 %s35, %s44
      %s83 = sor.u32 %s81, %s82
      %p84 = scmp.eq.s32.totalorder %s83, 0
      %s86 = sadd.s32 %s85, 1
      %s87 = scalar_select %p84, %s85, %s86
      %p90 = pneg %p84
      %p91 = scmp.eq.s32.totalorder %s26, 1
      %p92 = por %p90, %p91
      %p93 = scmp.ne.s32.totalorder %s85, %s88
      %p94 = scmp.eq.s32.totalorder %s26, 0
      %p95 = por %p93, %p94
      %p96 = scmp.ne.s32.totalorder %s85, %s88
      %p97 = scmp.eq.s32.totalorder %s31, 1
      %p98 = por %p96, %p97
      %p99 = scmp.ne.s32.totalorder %s88, %s89
      %p100 = scmp.eq.s32.totalorder %s31, 0
      %p101 = por %p99, %p100
      %p102 = scmp.ne.s32.totalorder %s88, %s89
      %p103 = scmp.eq.s32.totalorder %s32, 1
      %p104 = por %p102, %p103
      %p106 = scmp.ne.s32.totalorder %s89, %s105
      %p107 = scmp.eq.s32.totalorder %s32, 0
      %p108 = por %p106, %p107
      %s110 = sadd.s32 %s109, 1
      %p113 = scmp.eq.s32.totalorder %s26, 1
      %p114 = scmp.ne.s32.totalorder %s109, %s111
      %p115 = scmp.eq.s32.totalorder %s26, 0
      %p116 = por %p114, %p115
      %p117 = scmp.ne.s32.totalorder %s109, %s111
      %p118 = scmp.eq.s32.totalorder %s31, 1
      %p119 = por %p117, %p118
      %p120 = scmp.ne.s32.totalorder %s111, %s112
      %p121 = scmp.eq.s32.totalorder %s31, 0
      %p122 = por %p120, %p121
      %p123 = scmp.ne.s32.totalorder %s111, %s112
      %p124 = scmp.eq.s32.totalorder %s32, 1
      %p125 = por %p123, %p124
      %p127 = scmp.ne.s32.totalorder %s112, %s126
      %p128 = scmp.eq.s32.totalorder %s32, 0
      %p129 = por %p127, %p128
      %s131 = sadd.s32 %s130, 1
      %p134 = scmp.eq.s32.totalorder %s26, 1
      %p135 = scmp.ne.s32.totalorder %s130, %s132
      %p136 = scmp.eq.s32.totalorder %s26, 0
      %p137 = por %p135, %p136
      %p138 = scmp.ne.s32.totalorder %s130, %s132
      %p139 = scmp.eq.s32.totalorder %s31, 1
      %p140 = por %p138, %p139
      %p141 = scmp.ne.s32.totalorder %s132, %s133
      %p142 = scmp.eq.s32.totalorder %s31, 0
      %p143 = por %p141, %p142
      %p144 = scmp.ne.s32.totalorder %s132, %s133
      %p145 = scmp.eq.s32.totalorder %s32, 1
      %p146 = por %p144, %p145
      %p148 = scmp.ne.s32.totalorder %s133, %s147
      %p149 = scmp.eq.s32.totalorder %s32, 0
      %p150 = por %p148, %p149
      %s152 = sadd.s32 %s151, 1
      %p155 = scmp.eq.s32.totalorder %s26, 1
      %p156 = scmp.ne.s32.totalorder %s151, %s153
      %p157 = scmp.eq.s32.totalorder %s26, 0
      %p158 = por %p156, %p157
      %p159 = scmp.ne.s32.totalorder %s151, %s153
      %p160 = scmp.eq.s32.totalorder %s31, 1
      %p161 = por %p159, %p160
      %p162 = scmp.ne.s32.totalorder %s153, %s154
      %p163 = scmp.eq.s32.totalorder %s31, 0
      %p164 = por %p162, %p163
      %p165 = scmp.ne.s32.totalorder %s153, %s154
      %p166 = scmp.eq.s32.totalorder %s32, 1
      %p167 = por %p165, %p166
      %p169 = scmp.ne.s32.totalorder %s154, %s168
      %p170 = scmp.eq.s32.totalorder %s32, 0
      %p171 = por %p169, %p170
      %s173 = sadd.s32 %s172, 1
      %p176 = scmp.eq.s32.totalorder %s26, 1
      %p177 = scmp.ne.s32.totalorder %s172, %s174
      %p178 = scmp.eq.s32.totalorder %s26, 0
      %p179 = por %p177, %p178
      %p180 = scmp.ne.s32.totalorder %s172, %s174
      %p181 = scmp.eq.s32.totalorder %s31, 1
      %p182 = por %p180, %p181
      %p183 = scmp.ne.s32.totalorder %s174, %s175
      %p184 = scmp.eq.s32.totalorder %s31, 0
      %p185 = por %p183, %p184
      %p186 = scmp.ne.s32.totalorder %s174, %s175
      %p187 = scmp.eq.s32.totalorder %s32, 1
      %p188 = por %p186, %p187
      %p190 = scmp.ne.s32.totalorder %s175, %s189
      %p191 = scmp.eq.s32.totalorder %s32, 0
      %p192 = por %p190, %p191
      %s194 = sadd.s32 %s193, 1
      %p197 = scmp.eq.s32.totalorder %s26, 1
      %p198 = scmp.ne.s32.totalorder %s193, %s195
      %p199 = scmp.eq.s32.totalorder %s26, 0
      %p200 = por %p198, %p199
      %p201 = scmp.ne.s32.totalorder %s193, %s195
      %p202 = scmp.eq.s32.totalorder %s31, 1
      %p203 = por %p201, %p202
      %p204 = scmp.ne.s32.totalorder %s195, %s196
      %p205 = scmp.eq.s32.totalorder %s31, 0
      %p206 = por %p204, %p205
      %p207 = scmp.ne.s32.totalorder %s195, %s196
      %p208 = scmp.eq.s32.totalorder %s32, 1
      %p209 = por %p207, %p208
      %p211 = scmp.ne.s32.totalorder %s196, %s210
      %p212 = scmp.eq.s32.totalorder %s32, 0
      %p213 = por %p211, %p212
      %s214 = ssub.s32 %s33, %s52
      %p215 = scmp.eq.s32.totalorder %s214, 0
      %s217 = sadd.s32 %s216, 1
      %s218 = scalar_select %p215, %s216, %s217
      %p221 = pneg %p215
      %p222 = scmp.eq.s32.totalorder %s26, 1
      %p223 = por %p221, %p222
      %p224 = scmp.ne.s32.totalorder %s216, %s219
      %p225 = scmp.eq.s32.totalorder %s26, 0
      %p226 = por %p224, %p225
      %p227 = scmp.ne.s32.totalorder %s216, %s219
      %p228 = scmp.eq.s32.totalorder %s31, 1
      %p229 = por %p227, %p228
      %p230 = scmp.ne.s32.totalorder %s219, %s220
      %p231 = scmp.eq.s32.totalorder %s31, 0
      %p232 = por %p230, %p231
      %p233 = scmp.ne.s32.totalorder %s219, %s220
      %p234 = scmp.eq.s32.totalorder %s32, 1
      %p235 = por %p233, %p234
      %p237 = scmp.ne.s32.totalorder %s220, %s236
      %p238 = scmp.eq.s32.totalorder %s32, 0
      %p239 = por %p237, %p238
      %s240 = ssub.s32 %s33, %s52
      %p241 = scmp.eq.s32.totalorder %s240, 0
      %s243 = sadd.s32 %s242, 1
      %s244 = scalar_select %p241, %s242, %s243
      %p247 = pneg %p241
      %p248 = scmp.eq.s32.totalorder %s26, 1
      %p249 = por %p247, %p248
      %p250 = scmp.ne.s32.totalorder %s242, %s245
      %p251 = scmp.eq.s32.totalorder %s26, 0
      %p252 = por %p250, %p251
      %p253 = scmp.ne.s32.totalorder %s242, %s245
      %p254 = scmp.eq.s32.totalorder %s31, 1
      %p255 = por %p253, %p254
      %p256 = scmp.ne.s32.totalorder %s245, %s246
      %p257 = scmp.eq.s32.totalorder %s31, 0
      %p258 = por %p256, %p257
      %p259 = scmp.ne.s32.totalorder %s245, %s246
      %p260 = scmp.eq.s32.totalorder %s32, 1
      %p261 = por %p259, %p260
      %p263 = scmp.ne.s32.totalorder %s246, %s262
      %p264 = scmp.eq.s32.totalorder %s32, 0
      %p265 = por %p263, %p264
      %s266 = ssub.s32 %s33, %s52
      %p267 = scmp.eq.s32.totalorder %s266, 0
      %s269 = sadd.s32 %s268, 1
      %s270 = scalar_select %p267, %s268, %s269
      %p273 = pneg %p267
      %p274 = scmp.eq.s32.totalorder %s26, 1
      %p275 = por %p273, %p274
      %p276 = scmp.ne.s32.totalorder %s268, %s271
      %p277 = scmp.eq.s32.totalorder %s26, 0
      %p278 = por %p276, %p277
      %p279 = scmp.ne.s32.totalorder %s268, %s271
      %p280 = scmp.eq.s32.totalorder %s31, 1
      %p281 = por %p279, %p280
      %p282 = scmp.ne.s32.totalorder %s271, %s272
      %p283 = scmp.eq.s32.totalorder %s31, 0
      %p284 = por %p282, %p283
      %p285 = scmp.ne.s32.totalorder %s271, %s272
      %p286 = scmp.eq.s32.totalorder %s32, 1
      %p287 = por %p285, %p286
      %p289 = scmp.ne.s32.totalorder %s272, %s288
      %p290 = scmp.eq.s32.totalorder %s32, 0
      %p291 = por %p289, %p290
      %s292 = ssub.s32 %s33, %s52
      %p293 = scmp.eq.s32.totalorder %s292, 0
      %s295 = sadd.s32 %s294, 1
      %s296 = scalar_select %p293, %s294, %s295
      %p299 = pneg %p293
      %p300 = scmp.eq.s32.totalorder %s26, 1
      %p301 = por %p299, %p300
      %p302 = scmp.ne.s32.totalorder %s294, %s297
      %p303 = scmp.eq.s32.totalorder %s26, 0
      %p304 = por %p302, %p303
      %p305 = scmp.ne.s32.totalorder %s294, %s297
      %p306 = scmp.eq.s32.totalorder %s31, 1
      %p307 = por %p305, %p306
      %p308 = scmp.ne.s32.totalorder %s297, %s298
      %p309 = scmp.eq.s32.totalorder %s31, 0
      %p310 = por %p308, %p309
      %p311 = scmp.ne.s32.totalorder %s297, %s298
      %p312 = scmp.eq.s32.totalorder %s32, 1
      %p313 = por %p311, %p312
      %p315 = scmp.ne.s32.totalorder %s298, %s314
      %p316 = scmp.eq.s32.totalorder %s32, 0
      %p317 = por %p315, %p316
      %p318 = scmp.le.s32.totalorder 1, %s26
      %p319 = scmp.lt.s32.totalorder %s26, 3
      %p320 = pnand %p318, %p319
      %p321 = pneg %p320
      // Predicated region
      $region9: #{tpu_custom_call.1} parent=5 // pred_check
        _
      $region10: #{tpu_custom_call.1} parent=5 // pred_check_branch
        %323 = sbr.rel (%p320) target = $region12
      $region11: #{tpu_custom_call.1} parent=5 // pred_region
        %s324 = ssub.s32 %s26, 1
        // Predicated region
        $region13: #{tpu_custom_call.1} parent=11 // pred_check
          %p325 = pneg %p122
        $region14: #{tpu_custom_call.1} parent=11 // pred_check_branch
          %327 = sbr.rel (%p325) target = $region16
        $region15: #{tpu_custom_call.1} parent=11 // pred_region
          _
        $region16: #{tpu_custom_call.1} parent=11 // pred_fallthru
          _
        // Predicated region
        $region17: #{tpu_custom_call.1} parent=11 // pred_check
          %p328 = pneg %p143
        $region18: #{tpu_custom_call.1} parent=11 // pred_check_branch
          %330 = sbr.rel (%p328) target = $region20
        $region19: #{tpu_custom_call.1} parent=11 // pred_region
          _
        $region20: #{tpu_custom_call.1} parent=11 // pred_fallthru
          _
        // Predicated region
        $region21: #{tpu_custom_call.1} parent=11 // pred_check
          %p331 = pneg %p164
        $region22: #{tpu_custom_call.1} parent=11 // pred_check_branch
          %333 = sbr.rel (%p331) target = $region24
        $region23: #{tpu_custom_call.1} parent=11 // pred_region
          _
        $region24: #{tpu_custom_call.1} parent=11 // pred_fallthru
          _
        // Predicated region
        $region25: #{tpu_custom_call.1} parent=11 // pred_check
          %p334 = pneg %p185
        $region26: #{tpu_custom_call.1} parent=11 // pred_check_branch
          %336 = sbr.rel (%p334) target = $region28
        $region27: #{tpu_custom_call.1} parent=11 // pred_region
          _
        $region28: #{tpu_custom_call.1} parent=11 // pred_fallthru
          _
        // Predicated region
        $region29: #{tpu_custom_call.1} parent=11 // pred_check
          %p337 = pneg %p206
        $region30: #{tpu_custom_call.1} parent=11 // pred_check_branch
          %339 = sbr.rel (%p337) target = $region32
        $region31: #{tpu_custom_call.1} parent=11 // pred_region
          _
        $region32: #{tpu_custom_call.1} parent=11 // pred_fallthru
          _
      $region12: #{tpu_custom_call.1} parent=5 // pred_fallthru
        _
      %p340 = scmp.lt.s32.totalorder %s26, 2
      // Predicated region
      $region33: #{tpu_custom_call.1} parent=5 // pred_check
        %p341 = pneg %p340
      $region34: #{tpu_custom_call.1} parent=5 // pred_check_branch
        %343 = sbr.rel (%p341) target = $region36
      $region35: #{tpu_custom_call.1} parent=5 // pred_region
        // Predicated region
        $region37: #{tpu_custom_call.1} parent=35 // pred_check
          %p344 = pneg %p67
        $region38: #{tpu_custom_call.1} parent=35 // pred_check_branch
          %346 = sbr.rel (%p344) target = $region40
        $region39: #{tpu_custom_call.1} parent=35 // pred_region
          %p347 = scmp.lt.s32.totalorder %s33, 1
          %s348 = scalar_select %p347, %s33, 1
          %p349 = scmp.lt.s32.totalorder %s34, 0
          %s350 = scalar_select %p349, %s34, 0
          %s351 = sadd.s32 %s350, %s348
          %s352 = smul.addr %s351, 4
          %s353 = scalar_lea.vmem %s0, %s352
        $region40: #{tpu_custom_call.1} parent=35 // pred_fallthru
          _
        // Predicated region
        $region41: #{tpu_custom_call.1} parent=35 // pred_check
          %p354 = pneg %p95
        $region42: #{tpu_custom_call.1} parent=35 // pred_check_branch
          %356 = sbr.rel (%p354) target = $region44
        $region43: #{tpu_custom_call.1} parent=35 // pred_region
          %p357 = scmp.lt.s32.totalorder %s33, 1
          %s358 = scalar_select %p357, %s33, 1
          %p359 = scmp.lt.s32.totalorder %s35, 0
          %s360 = scalar_select %p359, %s35, 0
          %s361 = sadd.s32 %s360, %s358
          %s362 = smul.addr %s361, 4
          %s363 = scalar_lea.vmem %s1, %s362
        $region44: #{tpu_custom_call.1} parent=35 // pred_fallthru
          _
      $region36: #{tpu_custom_call.1} parent=5 // pred_fallthru
        _
      %p364 = scmp.le.s32.totalorder 1, %s26
      %p365 = scmp.lt.s32.totalorder %s26, 3
      %p366 = pnand %p364, %p365
      %p367 = pneg %p366
      // Predicated region
      $region45: #{tpu_custom_call.1} parent=5 // pred_check
        _
      $region46: #{tpu_custom_call.1} parent=5 // pred_check_branch
        %369 = sbr.rel (%p366) target = $region48
      $region47: #{tpu_custom_call.1} parent=5 // pred_region
        %s370 = ssub.s32 %s26, 1
        %p371 = scmp.lt.s32.totalorder %s36, 1
        %s372 = scalar_select %p371, %s36, 1
        %p373 = scmp.lt.s32.totalorder %s37, 0
        %s374 = scalar_select %p373, %s37, 0
        %s375 = sadd.s32 %s374, %s372
        %s376 = smul.addr %s375, 4
        %s377 = scalar_lea.vmem %s0, %s376
        %p378 = pneg %p73
        %p379 = pneg %p70
        %p380 = scmp.lt.s32.totalorder %s36, 1
        %s381 = scalar_select %p380, %s36, 1
        %p382 = scmp.lt.s32.totalorder %s38, 0
        %s383 = scalar_select %p382, %s38, 0
        %s384 = sadd.s32 %s383, %s381
        %s385 = smul.addr %s384, 4
        %s386 = scalar_lea.vmem %s1, %s385
        %p387 = pneg %p101
        %p388 = pneg %p98
        %p389 = pneg %p122
        %p390 = pneg %p119
        %p391 = pneg %p143
        %p392 = pneg %p140
        %p393 = pneg %p164
        %p394 = pneg %p161
        %p395 = pneg %p185
        %p396 = pneg %p182
        %p397 = pneg %p206
        %p398 = pneg %p203
        %p399 = pneg %p232
        %p400 = pneg %p229
        %s401 = sand.u32 %s219, 1
        %s402 = scalar_lea.sflag [#allocation7], %s401
        %s403 = sand.u32 %s219, 1
        %s404 = scalar_lea.vmem [#allocation6], %s403
        %p405 = pneg %p258
        %p406 = pneg %p255
        %s407 = sand.u32 %s31, 1
        %s408 = scalar_lea.sflag [#allocation9], %s407
        %s409 = sand.u32 %s245, 1
        %s410 = scalar_lea.vmem [#allocation8], %s409
        %p411 = pneg %p284
        %p412 = pneg %p281
        %s413 = sand.u32 %s31, 1
        %s414 = scalar_lea.sflag [#allocation9], %s413
        %s415 = sand.u32 %s271, 1
        %s416 = scalar_lea.vmem [#allocation10], %s415
        %p417 = pneg %p310
        %p418 = pneg %p307
        %s419 = sand.u32 %s297, 1
        %s420 = scalar_lea.sflag [#allocation12], %s419
        %s421 = sand.u32 %s297, 1
        %s422 = scalar_lea.vmem [#allocation11], %s421
        %p423 = scmp.lt.s32.totalorder %s36, 1
        %s424 = scalar_select %p423, %s36, 1
        %p425 = scmp.lt.s32.totalorder %s37, 0
        %s426 = scalar_select %p425, %s37, 0
        %s427 = sadd.s32 %s426, %s424
        %s428 = smul.addr %s427, 4
        %s429 = scalar_lea.vmem %s0, %s428
        %p430 = scmp.lt.s32.totalorder %s36, 1
        %s431 = scalar_select %p430, %s36, 1
        %p432 = scmp.lt.s32.totalorder %s38, 0
        %s433 = scalar_select %p432, %s38, 0
        %s434 = sadd.s32 %s433, %s431
        %s435 = smul.addr %s434, 4
        %s436 = scalar_lea.vmem %s1, %s435
        %v437 = vld [vmem:[%s429] sm:$0x7]
        %v438 = vld [vmem:[%s436] sm:$0x7]
        %p439 = scmp.eq.s32.totalorder %s37, 0
        %p440 = scmp.eq.s32.totalorder %s38, 0
        %p441 = pnand %p439, %p440
        %p442 = pneg %p441
        // Predicated region
        $region49: #{tpu_custom_call.1} parent=47 // pred_check
          _
        $region50: #{tpu_custom_call.1} parent=47 // pred_check_branch
          %444 = sbr.rel (%p441) target = $region52
        $region51: #{tpu_custom_call.1} parent=47 // pred_region
          %v445 = vld [vmem:[%s2] sm:$0x7]
          %v446 = vld [vmem:[%s3] sm:$0x7]
          %v447 = vsub.f32 %v445, %v446
          %v448 = vmul.f32 %v447, %v447
          %vm449 = vcmask 337920
          %v450 = vsel %vm449, %v448, 0.0
          %451 = vadd.xlane.f32.xlu0 %v450
          %v452 = vpop.xlane.xlu0 %451
          %v453 = vrot.slane %v452, 4
          %v454 = vadd.f32 %v452, %v453
          %v455 = vrot.slane %v454, 2
          %v456 = vadd.f32 %v454, %v455
          %v457 = vrot.slane %v456, 1
          %v458 = vadd.f32 %v456, %v457
          %s459 = vtos %v458
          %s460 = smul.f32 %s459, 0.007936508
          %v461 = vstv %s460
          %462 = vst [vmem:[%s416] sm:$0x1] %v461
          %v463 = vld [vmem:[%s4] sm:$0x7]
          %v464 = vld [vmem:[%s5] sm:$0x7]
          %v465 = vsub.f32 %v464, %v463
          %v466 = vmax.f32 %v465, 0.0
          %v467 = vld [vmem:[%s6] sm:$0x7]
          %v468 = vsub.f32 %v463, %v467
          %v469 = vmax.f32 %v468, 0.0
          %v470 = vadd.f32 %v466, %v469
          %v471 = vsel %vm449, %v470, 0.0
          %472 = vadd.xlane.f32.xlu0 %v471
          %v473 = vpop.xlane.xlu0 %472
          %v474 = vrot.slane %v473, 4
          %v475 = vadd.f32 %v473, %v474
          %v476 = vrot.slane %v475, 2
          %v477 = vadd.f32 %v475, %v476
          %v478 = vrot.slane %v477, 1
          %v479 = vadd.f32 %v477, %v478
          %s480 = vtos %v479
          %s481 = smul.f32 %s480, 0.023809524
          %v482 = vstv %s481
          %483 = vst [vmem:[%s422] sm:$0x1] %v482
          %484 = vst [vmem:[%s404] sm:$0x1] 0.0
          %485 = vst [vmem:[%s410] sm:$0x1] 0.0
        $region52: #{tpu_custom_call.1} parent=47 // pred_fallthru
          _
        // Predicated region
        $region53: #{tpu_custom_call.1} parent=47 // pred_check
          %p486 = pneg %p440
        $region54: #{tpu_custom_call.1} parent=47 // pred_check_branch
          %488 = sbr.rel (%p486) target = $region56
        $region55: #{tpu_custom_call.1} parent=47 // pred_region
          %v489 = vmul.f32 %v437, %v437
          %490 = vxpose.xlu0.b32.start [1/16] %v489, 128
          %491 = vxpose.xlu0.b32.cont [2/16] 0.0, 128
          %492 = vxpose.xlu0.b32.cont [3/16] 0.0, 128
          %493 = vxpose.xlu0.b32.cont [4/16] 0.0, 128
          %494 = vxpose.xlu0.b32.cont [5/16] 0.0, 128
          %495 = vxpose.xlu0.b32.cont [6/16] 0.0, 128
          %496 = vxpose.xlu0.b32.cont [7/16] 0.0, 128
          %497 = vxpose.xlu0.b32.cont [8/16] 0.0, 128
          %498 = vxpose.xlu0.b32.cont [9/16] 0.0, 128
          %499 = vxpose.xlu0.b32.cont [10/16] 0.0, 128
          %500 = vxpose.xlu0.b32.cont [11/16] 0.0, 128
          %501 = vxpose.xlu0.b32.cont [12/16] 0.0, 128
          %502 = vxpose.xlu0.b32.cont [13/16] 0.0, 128
          %503 = vxpose.xlu0.b32.cont [14/16] 0.0, 128
          %504 = vxpose.xlu0.b32.cont [15/16] 0.0, 128
          %505 = vxpose.xlu0.b32.end [16/16] 0.0, 128
          %v506 = vpop.trf.xlu0
          %v507 = vpop.trf.xlu0
          %v508 = vpop.trf.xlu0
          %v509 = vpop.trf.xlu0
          %v510 = vpop.trf.xlu0
          %v511 = vpop.trf.xlu0
          %v512 = vpop.trf.xlu0
          %v513 = vpop.trf.xlu0
          %v514 = vpop.trf.xlu0
          %v515 = vpop.trf.xlu0
          %v516 = vpop.trf.xlu0
          %v517 = vpop.trf.xlu0
          %v518 = vpop.trf.xlu0
          %v519 = vpop.trf.xlu0
          %v520 = vpop.trf.xlu0
          %v521 = vpop.trf.xlu0
          %vm522 = vcmask 23552
          %v524 = vsel %vm522, %v506, 0
          %v527 = vsel %vm522, %v507, 0
          %v530 = vsel %vm522, %v508, 0
          %v533 = vsel %vm522, %v509, 0
          %v536 = vsel %vm522, %v510, 0
          %v539 = vsel %vm522, %v511, 0
          %v542 = vsel %vm522, %v512, 0
          %v545 = vsel %vm522, %v513, 0
          %v548 = vsel %vm522, %v514, 0
          %v551 = vsel %vm522, %v515, 0
          %v554 = vsel %vm522, %v516, 0
          %v557 = vsel %vm522, %v517, 0
          %v560 = vsel %vm522, %v518, 0
          %v563 = vsel %vm522, %v519, 0
          %v566 = vsel %vm522, %v520, 0
          %v569 = vsel %vm522, %v521, 0
          %vm571 = vcmask 1042432
          %v573 = vsel %vm571, 1.0, 0
          %575 = vmatpush.msra.mxu0 0.0
          %576 = vmatpush.msra.mxu0 0.0
          %577 = vmatpush.msra.mxu0 0.0
          %578 = vmatpush.msra.mxu0 0.0
          %579 = vmatpush.msra.mxu0 0.0
          %580 = vmatpush.msra.mxu0 0.0
          %581 = vmatpush.msra.mxu0 0.0
          %582 = vmatpush.msra.mxu0 0.0
          %583 = vmatpush.msra.mxu0 0.0
          %584 = vmatpush.msra.mxu0 0.0
          %585 = vmatpush.msra.mxu0 0.0
          %586 = vmatpush.msra.mxu0 0.0
          %587 = vmatpush.msra.mxu0 0.0
          %588 = vmatpush.msra.mxu0 0.0
          %589 = vmatpush.msra.mxu0 0.0
          %590 = vmatpush.msra.mxu0 %v573
          %591 = vmatmul.f32.gmra.mxu0 %v524
          %v592 = vpop.f32.mrf.mxu0
          %v593 = vadd.f32 0.0, %v592
          %594 = vmatmul.f32.gmra.mxu0 %v527
          %v595 = vpop.f32.mrf.mxu0
          %v596 = vadd.f32 0.0, %v595
          %597 = vmatmul.f32.gmra.mxu0 %v530
          %v598 = vpop.f32.mrf.mxu0
          %v599 = vadd.f32 0.0, %v598
          %600 = vmatmul.f32.gmra.mxu0 %v533
          %v601 = vpop.f32.mrf.mxu0
          %v602 = vadd.f32 0.0, %v601
          %603 = vmatmul.f32.gmra.mxu0 %v536
          %v604 = vpop.f32.mrf.mxu0
          %v605 = vadd.f32 0.0, %v604
          %606 = vmatmul.f32.gmra.mxu0 %v539
          %v607 = vpop.f32.mrf.mxu0
          %v608 = vadd.f32 0.0, %v607
          %609 = vmatmul.f32.gmra.mxu0 %v542
          %v610 = vpop.f32.mrf.mxu0
          %v611 = vadd.f32 0.0, %v610
          %612 = vmatmul.f32.gmra.mxu0 %v545
          %v613 = vpop.f32.mrf.mxu0
          %v614 = vadd.f32 0.0, %v613
          %615 = vmatmul.f32.gmra.mxu0 %v548
          %v616 = vpop.f32.mrf.mxu0
          %v617 = vadd.f32 0.0, %v616
          %618 = vmatmul.f32.gmra.mxu0 %v551
          %v619 = vpop.f32.mrf.mxu0
          %v620 = vadd.f32 0.0, %v619
          %621 = vmatmul.f32.gmra.mxu0 %v554
          %v622 = vpop.f32.mrf.mxu0
          %v623 = vadd.f32 0.0, %v622
          %624 = vmatmul.f32.gmra.mxu0 %v557
          %v625 = vpop.f32.mrf.mxu0
          %v626 = vadd.f32 0.0, %v625
          %627 = vmatmul.f32.gmra.mxu0 %v560
          %v628 = vpop.f32.mrf.mxu0
          %v629 = vadd.f32 0.0, %v628
          %630 = vmatmul.f32.gmra.mxu0 %v563
          %v631 = vpop.f32.mrf.mxu0
          %v632 = vadd.f32 0.0, %v631
          %633 = vmatmul.f32.gmra.mxu0 %v566
          %v634 = vpop.f32.mrf.mxu0
          %v635 = vadd.f32 0.0, %v634
          %636 = vmatmul.f32.gmra.mxu0 %v569
          %v637 = vpop.f32.mrf.mxu0
          %v638 = vadd.f32 0.0, %v637
          %639 = vdwg.mxu0
          %640 = vst [vmem:[#allocation2] sm:$0xff] %v593
          %641 = vst [vmem:[#allocation2 + $0x8] sm:$0xff] %v596
          %642 = vst [vmem:[#allocation2 + $0x10] sm:$0xff] %v599
          %643 = vst [vmem:[#allocation2 + $0x18] sm:$0xff] %v602
          %644 = vst [vmem:[#allocation2 + $0x20] sm:$0xff] %v605
          %645 = vst [vmem:[#allocation2 + $0x28] sm:$0xff] %v608
          %646 = vst [vmem:[#allocation2 + $0x30] sm:$0xff] %v611
          %647 = vst [vmem:[#allocation2 + $0x38] sm:$0xff] %v614
          %648 = vst [vmem:[#allocation2 + $0x40] sm:$0xff] %v617
          %649 = vst [vmem:[#allocation2 + $0x48] sm:$0xff] %v620
          %650 = vst [vmem:[#allocation2 + $0x50] sm:$0xff] %v623
          %651 = vst [vmem:[#allocation2 + $0x58] sm:$0xff] %v626
          %652 = vst [vmem:[#allocation2 + $0x60] sm:$0xff] %v629
          %653 = vst [vmem:[#allocation2 + $0x68] sm:$0xff] %v632
          %654 = vst [vmem:[#allocation2 + $0x70] sm:$0xff] %v635
          %655 = vst [vmem:[#allocation2 + $0x78] sm:$0xff] %v638
        $region56: #{tpu_custom_call.1} parent=47 // pred_fallthru
          _
        %s656 = smul.u32 %s38, 128
        // Predicated region
        $region57: #{tpu_custom_call.1} parent=47 // pred_check
          %p657 = pneg %p439
        $region58: #{tpu_custom_call.1} parent=47 // pred_check_branch
          %659 = sbr.rel (%p657) target = $region60
        $region59: #{tpu_custom_call.1} parent=47 // pred_region
          %v660 = vmul.f32 %v438, %v438
          %vm661 = vcmask 1042432
          %v662 = vsel %vm661, %v660, 0.0
          %v663 = vrot.slane %v662, 4
          %v664 = vadd.f32 %v662, %v663
          %v665 = vrot.slane %v664, 2
          %v666 = vadd.f32 %v664, %v665
          %v667 = vrot.slane %v666, 1
          %v668 = vadd.f32 %v666, %v667
          %s669 = sshra.s32 %s656, 7
          %s670 = sand.u32 %s656, 127
          %s671 = scalar_lea.vmem [#allocation3], %s669
          %672 = vst [vmem:[%s671] sm:$0x1] %v668
        $region60: #{tpu_custom_call.1} parent=47 // pred_fallthru
          _
        %673 = vxpose.xlu0.b32.start [1/16] %v437, 128
        %674 = vxpose.xlu0.b32.cont [2/16] 0.0, 128
        %675 = vxpose.xlu0.b32.cont [3/16] 0.0, 128
        %676 = vxpose.xlu0.b32.cont [4/16] 0.0, 128
        %677 = vxpose.xlu0.b32.cont [5/16] 0.0, 128
        %678 = vxpose.xlu0.b32.cont [6/16] 0.0, 128
        %679 = vxpose.xlu0.b32.cont [7/16] 0.0, 128
        %680 = vxpose.xlu0.b32.cont [8/16] 0.0, 128
        %681 = vxpose.xlu0.b32.cont [9/16] 0.0, 128
        %682 = vxpose.xlu0.b32.cont [10/16] 0.0, 128
        %683 = vxpose.xlu0.b32.cont [11/16] 0.0, 128
        %684 = vxpose.xlu0.b32.cont [12/16] 0.0, 128
        %685 = vxpose.xlu0.b32.cont [13/16] 0.0, 128
        %686 = vxpose.xlu0.b32.cont [14/16] 0.0, 128
        %687 = vxpose.xlu0.b32.cont [15/16] 0.0, 128
        %688 = vxpose.xlu0.b32.end [16/16] 0.0, 128
        %v689 = vpop.trf.xlu0
        %v690 = vpop.trf.xlu0
        %v691 = vpop.trf.xlu0
        %v692 = vpop.trf.xlu0
        %v693 = vpop.trf.xlu0
        %v694 = vpop.trf.xlu0
        %v695 = vpop.trf.xlu0
        %v696 = vpop.trf.xlu0
        %v697 = vpop.trf.xlu0
        %v698 = vpop.trf.xlu0
        %v699 = vpop.trf.xlu0
        %v700 = vpop.trf.xlu0
        %v701 = vpop.trf.xlu0
        %v702 = vpop.trf.xlu0
        %v703 = vpop.trf.xlu0
        %v704 = vpop.trf.xlu0
        %vm705 = vcmask 23552
        %v707 = vsel %vm705, %v689, 0
        %v710 = vsel %vm705, %v690, 0
        %v713 = vsel %vm705, %v691, 0
        %v716 = vsel %vm705, %v692, 0
        %v719 = vsel %vm705, %v693, 0
        %v722 = vsel %vm705, %v694, 0
        %v725 = vsel %vm705, %v695, 0
        %v728 = vsel %vm705, %v696, 0
        %v731 = vsel %vm705, %v697, 0
        %v734 = vsel %vm705, %v698, 0
        %v737 = vsel %vm705, %v699, 0
        %v740 = vsel %vm705, %v700, 0
        %v743 = vsel %vm705, %v701, 0
        %v746 = vsel %vm705, %v702, 0
        %v749 = vsel %vm705, %v703, 0
        %v752 = vsel %vm705, %v704, 0
        %vm754 = vcmask 1042432
        %v756 = vsel %vm754, %v438, 0
        %758 = vmatpush.msra.mxu0 0.0
        %759 = vmatpush.msra.mxu0 0.0
        %760 = vmatpush.msra.mxu0 0.0
        %761 = vmatpush.msra.mxu0 0.0
        %762 = vmatpush.msra.mxu0 0.0
        %763 = vmatpush.msra.mxu0 0.0
        %764 = vmatpush.msra.mxu0 0.0
        %765 = vmatpush.msra.mxu0 0.0
        %766 = vmatpush.msra.mxu0 0.0
        %767 = vmatpush.msra.mxu0 0.0
        %768 = vmatpush.msra.mxu0 0.0
        %769 = vmatpush.msra.mxu0 0.0
        %770 = vmatpush.msra.mxu0 0.0
        %771 = vmatpush.msra.mxu0 0.0
        %772 = vmatpush.msra.mxu0 0.0
        %773 = vmatpush.msra.mxu0 %v756
        %774 = vmatmul.f32.gmra.mxu0 %v707
        %v775 = vpop.f32.mrf.mxu0
        %v776 = vadd.f32 0.0, %v775
        %777 = vmatmul.f32.gmra.mxu0 %v710
        %v778 = vpop.f32.mrf.mxu0
        %v779 = vadd.f32 0.0, %v778
        %780 = vmatmul.f32.gmra.mxu0 %v713
        %v781 = vpop.f32.mrf.mxu0
        %v782 = vadd.f32 0.0, %v781
        %783 = vmatmul.f32.gmra.mxu0 %v716
        %v784 = vpop.f32.mrf.mxu0
        %v785 = vadd.f32 0.0, %v784
        %786 = vmatmul.f32.gmra.mxu0 %v719
        %v787 = vpop.f32.mrf.mxu0
        %v788 = vadd.f32 0.0, %v787
        %789 = vmatmul.f32.gmra.mxu0 %v722
        %v790 = vpop.f32.mrf.mxu0
        %v791 = vadd.f32 0.0, %v790
        %792 = vmatmul.f32.gmra.mxu0 %v725
        %v793 = vpop.f32.mrf.mxu0
        %v794 = vadd.f32 0.0, %v793
        %795 = vmatmul.f32.gmra.mxu0 %v728
        %v796 = vpop.f32.mrf.mxu0
        %v797 = vadd.f32 0.0, %v796
        %798 = vmatmul.f32.gmra.mxu0 %v731
        %v799 = vpop.f32.mrf.mxu0
        %v800 = vadd.f32 0.0, %v799
        %801 = vmatmul.f32.gmra.mxu0 %v734
        %v802 = vpop.f32.mrf.mxu0
        %v803 = vadd.f32 0.0, %v802
        %804 = vmatmul.f32.gmra.mxu0 %v737
        %v805 = vpop.f32.mrf.mxu0
        %v806 = vadd.f32 0.0, %v805
        %807 = vmatmul.f32.gmra.mxu0 %v740
        %v808 = vpop.f32.mrf.mxu0
        %v809 = vadd.f32 0.0, %v808
        %810 = vmatmul.f32.gmra.mxu0 %v743
        %v811 = vpop.f32.mrf.mxu0
        %v812 = vadd.f32 0.0, %v811
        %813 = vmatmul.f32.gmra.mxu0 %v746
        %v814 = vpop.f32.mrf.mxu0
        %v815 = vadd.f32 0.0, %v814
        %816 = vmatmul.f32.gmra.mxu0 %v749
        %v817 = vpop.f32.mrf.mxu0
        %v818 = vadd.f32 0.0, %v817
        %819 = vmatmul.f32.gmra.mxu0 %v752
        %v820 = vpop.f32.mrf.mxu0
        %v821 = vadd.f32 0.0, %v820
        %822 = vdwg.mxu0
        %v823 = vld [vmem:[#allocation2] sm:$0xff]
        %v824 = vld [vmem:[#allocation2 + $0x8] sm:$0xff]
        %v825 = vld [vmem:[#allocation2 + $0x10] sm:$0xff]
        %v826 = vld [vmem:[#allocation2 + $0x18] sm:$0xff]
        %v827 = vld [vmem:[#allocation2 + $0x20] sm:$0xff]
        %v828 = vld [vmem:[#allocation2 + $0x28] sm:$0xff]
        %v829 = vld [vmem:[#allocation2 + $0x30] sm:$0xff]
        %v830 = vld [vmem:[#allocation2 + $0x38] sm:$0xff]
        %v831 = vld [vmem:[#allocation2 + $0x40] sm:$0xff]
        %v832 = vld [vmem:[#allocation2 + $0x48] sm:$0xff]
        %v833 = vld [vmem:[#allocation2 + $0x50] sm:$0xff]
        %v834 = vld [vmem:[#allocation2 + $0x58] sm:$0xff]
        %v835 = vld [vmem:[#allocation2 + $0x60] sm:$0xff]
        %v836 = vld [vmem:[#allocation2 + $0x68] sm:$0xff]
        %v837 = vld [vmem:[#allocation2 + $0x70] sm:$0xff]
        %v838 = vld [vmem:[#allocation2 + $0x78] sm:$0xff]
        %s839 = sshra.s32 %s656, 7
        %s840 = sand.u32 %s656, 127
        %s841 = scalar_lea.vmem [#allocation3], %s839
        %v842 = vld [vmem:[%s841] sm:$0x1]
        %v843 = vmul.f32 %v776, 2.0
        %v844 = vmul.f32 %v779, 2.0
        %v845 = vmul.f32 %v782, 2.0
        %v846 = vmul.f32 %v785, 2.0
        %v847 = vmul.f32 %v788, 2.0
        %v848 = vmul.f32 %v791, 2.0
        %v849 = vmul.f32 %v794, 2.0
        %v850 = vmul.f32 %v797, 2.0
        %v851 = vmul.f32 %v800, 2.0
        %v852 = vmul.f32 %v803, 2.0
        %v853 = vmul.f32 %v806, 2.0
        %v854 = vmul.f32 %v809, 2.0
        %v855 = vmul.f32 %v812, 2.0
        %v856 = vmul.f32 %v815, 2.0
        %v857 = vmul.f32 %v818, 2.0
        %v858 = vmul.f32 %v821, 2.0
        %v860 = vperm.slane %v842, 0
        %v862 = vsub.f32 %v860, %v843
        %v863 = vsub.f32 %v860, %v844
        %v864 = vsub.f32 %v860, %v845
        %v865 = vsub.f32 %v860, %v846
        %v866 = vsub.f32 %v860, %v847
        %v867 = vsub.f32 %v860, %v848
        %v868 = vsub.f32 %v860, %v849
        %v869 = vsub.f32 %v860, %v850
        %v870 = vsub.f32 %v860, %v851
        %v871 = vsub.f32 %v860, %v852
        %v872 = vsub.f32 %v860, %v853
        %v873 = vsub.f32 %v860, %v854
        %v874 = vsub.f32 %v860, %v855
        %v875 = vsub.f32 %v860, %v856
        %v876 = vsub.f32 %v860, %v857
        %v877 = vsub.f32 %v860, %v858
        %v878 = vadd.f32 %v862, %v823
        %v879 = vadd.f32 %v863, %v824
        %v880 = vadd.f32 %v864, %v825
        %v881 = vadd.f32 %v865, %v826
        %v882 = vadd.f32 %v866, %v827
        %v883 = vadd.f32 %v867, %v828
        %v884 = vadd.f32 %v868, %v829
        %v885 = vadd.f32 %v869, %v830
        %v886 = vadd.f32 %v870, %v831
        %v887 = vadd.f32 %v871, %v832
        %v888 = vadd.f32 %v872, %v833
        %v889 = vadd.f32 %v873, %v834
        %v890 = vadd.f32 %v874, %v835
        %v891 = vadd.f32 %v875, %v836
        %v892 = vadd.f32 %v876, %v837
        %v893 = vadd.f32 %v877, %v838
        %v894 = vmin.f32 %v878, %v882
        %v895 = vmin.f32 %v879, %v883
        %v896 = vmin.f32 %v880, %v884
        %v897 = vmin.f32 %v881, %v885
        %v898 = vmin.f32 %v894, %v886
        %v899 = vmin.f32 %v895, %v887
        %v900 = vmin.f32 %v896, %v888
        %v901 = vmin.f32 %v897, %v889
        %v902 = vmin.f32 %v898, %v890
        %v903 = vmin.f32 %v899, %v891
        %v904 = vmin.f32 %v900, %v892
        %v905 = vmin.f32 %v901, %v893
        %v906 = vmin.f32 %v902, %v903
        %v907 = vmin.f32 %v904, %v905
        %v908 = vmin.f32 %v906, %v907
        %v909 = vrot.slane %v908, 4
        %v910 = vmin.f32 %v908, %v909
        %v911 = vrot.slane %v910, 2
        %v912 = vmin.f32 %v910, %v911
        %v913 = vrot.slane %v912, 1
        %v914 = vmin.f32 %v912, %v913
        // Predicated region
        $region61: #{tpu_custom_call.1} parent=47 // pred_check
          %p915 = pneg %p440
        $region62: #{tpu_custom_call.1} parent=47 // pred_check_branch
          %917 = sbr.rel (%p915) target = $region64
        $region63: #{tpu_custom_call.1} parent=47 // pred_region
          %918 = vst [vmem:[#allocation4] sm:$0xff] %v878
          %919 = vst [vmem:[#allocation4 + $0x8] sm:$0xff] %v879
          %920 = vst [vmem:[#allocation4 + $0x10] sm:$0xff] %v880
          %921 = vst [vmem:[#allocation4 + $0x18] sm:$0xff] %v881
          %922 = vst [vmem:[#allocation4 + $0x20] sm:$0xff] %v882
          %923 = vst [vmem:[#allocation4 + $0x28] sm:$0xff] %v883
          %924 = vst [vmem:[#allocation4 + $0x30] sm:$0xff] %v884
          %925 = vst [vmem:[#allocation4 + $0x38] sm:$0xff] %v885
          %926 = vst [vmem:[#allocation4 + $0x40] sm:$0xff] %v886
          %927 = vst [vmem:[#allocation4 + $0x48] sm:$0xff] %v887
          %928 = vst [vmem:[#allocation4 + $0x50] sm:$0xff] %v888
          %929 = vst [vmem:[#allocation4 + $0x58] sm:$0xff] %v889
          %930 = vst [vmem:[#allocation4 + $0x60] sm:$0xff] %v890
          %931 = vst [vmem:[#allocation4 + $0x68] sm:$0xff] %v891
          %932 = vst [vmem:[#allocation4 + $0x70] sm:$0xff] %v892
          %933 = vst [vmem:[#allocation4 + $0x78] sm:$0xff] %v893
        $region64: #{tpu_custom_call.1} parent=47 // pred_fallthru
          _
        %p934 = scmp.ne.s32.totalorder %s38, 0
        // Predicated region
        $region65: #{tpu_custom_call.1} parent=47 // pred_check
          %p935 = pneg %p934
        $region66: #{tpu_custom_call.1} parent=47 // pred_check_branch
          %937 = sbr.rel (%p935) target = $region68
        $region67: #{tpu_custom_call.1} parent=47 // pred_region
          %v938 = vld [vmem:[#allocation4] sm:$0xff]
          %v939 = vld [vmem:[#allocation4 + $0x8] sm:$0xff]
          %v940 = vld [vmem:[#allocation4 + $0x10] sm:$0xff]
          %v941 = vld [vmem:[#allocation4 + $0x18] sm:$0xff]
          %v942 = vld [vmem:[#allocation4 + $0x20] sm:$0xff]
          %v943 = vld [vmem:[#allocation4 + $0x28] sm:$0xff]
          %v944 = vld [vmem:[#allocation4 + $0x30] sm:$0xff]
          %v945 = vld [vmem:[#allocation4 + $0x38] sm:$0xff]
          %v946 = vld [vmem:[#allocation4 + $0x40] sm:$0xff]
          %v947 = vld [vmem:[#allocation4 + $0x48] sm:$0xff]
          %v948 = vld [vmem:[#allocation4 + $0x50] sm:$0xff]
          %v949 = vld [vmem:[#allocation4 + $0x58] sm:$0xff]
          %v950 = vld [vmem:[#allocation4 + $0x60] sm:$0xff]
          %v951 = vld [vmem:[#allocation4 + $0x68] sm:$0xff]
          %v952 = vld [vmem:[#allocation4 + $0x70] sm:$0xff]
          %v953 = vld [vmem:[#allocation4 + $0x78] sm:$0xff]
          %v954 = vmin.f32 %v938, %v878
          %v955 = vmin.f32 %v939, %v879
          %v956 = vmin.f32 %v940, %v880
          %v957 = vmin.f32 %v941, %v881
          %v958 = vmin.f32 %v942, %v882
          %v959 = vmin.f32 %v943, %v883
          %v960 = vmin.f32 %v944, %v884
          %v961 = vmin.f32 %v945, %v885
          %v962 = vmin.f32 %v946, %v886
          %v963 = vmin.f32 %v947, %v887
          %v964 = vmin.f32 %v948, %v888
          %v965 = vmin.f32 %v949, %v889
          %v966 = vmin.f32 %v950, %v890
          %v967 = vmin.f32 %v951, %v891
          %v968 = vmin.f32 %v952, %v892
          %v969 = vmin.f32 %v953, %v893
          %970 = vst [vmem:[#allocation4] sm:$0xff] %v954
          %971 = vst [vmem:[#allocation4 + $0x8] sm:$0xff] %v955
          %972 = vst [vmem:[#allocation4 + $0x10] sm:$0xff] %v956
          %973 = vst [vmem:[#allocation4 + $0x18] sm:$0xff] %v957
          %974 = vst [vmem:[#allocation4 + $0x20] sm:$0xff] %v958
          %975 = vst [vmem:[#allocation4 + $0x28] sm:$0xff] %v959
          %976 = vst [vmem:[#allocation4 + $0x30] sm:$0xff] %v960
          %977 = vst [vmem:[#allocation4 + $0x38] sm:$0xff] %v961
          %978 = vst [vmem:[#allocation4 + $0x40] sm:$0xff] %v962
          %979 = vst [vmem:[#allocation4 + $0x48] sm:$0xff] %v963
          %980 = vst [vmem:[#allocation4 + $0x50] sm:$0xff] %v964
          %981 = vst [vmem:[#allocation4 + $0x58] sm:$0xff] %v965
          %982 = vst [vmem:[#allocation4 + $0x60] sm:$0xff] %v966
          %983 = vst [vmem:[#allocation4 + $0x68] sm:$0xff] %v967
          %984 = vst [vmem:[#allocation4 + $0x70] sm:$0xff] %v968
          %985 = vst [vmem:[#allocation4 + $0x78] sm:$0xff] %v969
        $region68: #{tpu_custom_call.1} parent=47 // pred_fallthru
          _
        // Predicated region
        $region69: #{tpu_custom_call.1} parent=47 // pred_check
          %p986 = pneg %p439
        $region70: #{tpu_custom_call.1} parent=47 // pred_check_branch
          %988 = sbr.rel (%p986) target = $region72
        $region71: #{tpu_custom_call.1} parent=47 // pred_region
          %s989 = scalar_lea.vmem [#allocation5], %s839
          %990 = vst [vmem:[%s989] sm:$0x1] %v914
        $region72: #{tpu_custom_call.1} parent=47 // pred_fallthru
          _
        %p991 = scmp.ne.s32.totalorder %s37, 0
        // Predicated region
        $region73: #{tpu_custom_call.1} parent=47 // pred_check
          %p992 = pneg %p991
        $region74: #{tpu_custom_call.1} parent=47 // pred_check_branch
          %994 = sbr.rel (%p992) target = $region76
        $region75: #{tpu_custom_call.1} parent=47 // pred_region
          %s995 = scalar_lea.vmem [#allocation5], %s839
          %v996 = vld [vmem:[%s995] sm:$0x1]
          %v997 = vmin.f32 %v996, %v914
          %998 = vst [vmem:[%s995] sm:$0x1] %v997
        $region76: #{tpu_custom_call.1} parent=47 // pred_fallthru
          _
        // Predicated region
        $region77: #{tpu_custom_call.1} parent=47 // pred_check
          %p999 = pneg %p440
        $region78: #{tpu_custom_call.1} parent=47 // pred_check_branch
          %1001 = sbr.rel (%p999) target = $region80
        $region79: #{tpu_custom_call.1} parent=47 // pred_region
          %v1002 = vld [vmem:[#allocation4] sm:$0xff]
          %v1003 = vld [vmem:[#allocation4 + $0x8] sm:$0xff]
          %v1004 = vld [vmem:[#allocation4 + $0x10] sm:$0xff]
          %v1005 = vld [vmem:[#allocation4 + $0x18] sm:$0xff]
          %v1006 = vld [vmem:[#allocation4 + $0x20] sm:$0xff]
          %v1007 = vld [vmem:[#allocation4 + $0x28] sm:$0xff]
          %v1008 = vld [vmem:[#allocation4 + $0x30] sm:$0xff]
          %v1009 = vld [vmem:[#allocation4 + $0x38] sm:$0xff]
          %v1010 = vld [vmem:[#allocation4 + $0x40] sm:$0xff]
          %v1011 = vld [vmem:[#allocation4 + $0x48] sm:$0xff]
          %v1012 = vld [vmem:[#allocation4 + $0x50] sm:$0xff]
          %v1013 = vld [vmem:[#allocation4 + $0x58] sm:$0xff]
          %v1014 = vld [vmem:[#allocation4 + $0x60] sm:$0xff]
          %v1015 = vld [vmem:[#allocation4 + $0x68] sm:$0xff]
          %v1016 = vld [vmem:[#allocation4 + $0x70] sm:$0xff]
          %v1017 = vld [vmem:[#allocation4 + $0x78] sm:$0xff]
          %1018 = vmin.xlane.f32.xlu0 %v1002
          %v1019 = vpop.xlane.xlu0 %1018
          %1020 = vmin.xlane.f32.xlu0 %v1003
          %v1021 = vpop.xlane.xlu0 %1020
          %1022 = vmin.xlane.f32.xlu0 %v1004
          %v1023 = vpop.xlane.xlu0 %1022
          %1024 = vmin.xlane.f32.xlu0 %v1005
          %v1025 = vpop.xlane.xlu0 %1024
          %1026 = vmin.xlane.f32.xlu0 %v1006
          %v1027 = vpop.xlane.xlu0 %1026
          %1028 = vmin.xlane.f32.xlu0 %v1007
          %v1029 = vpop.xlane.xlu0 %1028
          %1030 = vmin.xlane.f32.xlu0 %v1008
          %v1031 = vpop.xlane.xlu0 %1030
          %1032 = vmin.xlane.f32.xlu0 %v1009
          %v1033 = vpop.xlane.xlu0 %1032
          %1034 = vmin.xlane.f32.xlu0 %v1010
          %v1035 = vpop.xlane.xlu0 %1034
          %1036 = vmin.xlane.f32.xlu0 %v1011
          %v1037 = vpop.xlane.xlu0 %1036
          %1038 = vmin.xlane.f32.xlu0 %v1012
          %v1039 = vpop.xlane.xlu0 %1038
          %1040 = vmin.xlane.f32.xlu0 %v1013
          %v1041 = vpop.xlane.xlu0 %1040
          %1042 = vmin.xlane.f32.xlu0 %v1014
          %v1043 = vpop.xlane.xlu0 %1042
          %1044 = vmin.xlane.f32.xlu0 %v1015
          %v1045 = vpop.xlane.xlu0 %1044
          %1046 = vmin.xlane.f32.xlu0 %v1016
          %v1047 = vpop.xlane.xlu0 %1046
          %1048 = vmin.xlane.f32.xlu0 %v1017
          %v1049 = vpop.xlane.xlu0 %1048
          %v1050 = vmax.f32 %v1019, 0.0
          %v1051 = vmax.f32 %v1021, 0.0
          %v1052 = vmax.f32 %v1023, 0.0
          %v1053 = vmax.f32 %v1025, 0.0
          %v1054 = vmax.f32 %v1027, 0.0
          %v1055 = vmax.f32 %v1029, 0.0
          %v1056 = vmax.f32 %v1031, 0.0
          %v1057 = vmax.f32 %v1033, 0.0
          %v1058 = vmax.f32 %v1035, 0.0
          %v1059 = vmax.f32 %v1037, 0.0
          %v1060 = vmax.f32 %v1039, 0.0
          %v1061 = vmax.f32 %v1041, 0.0
          %v1062 = vmax.f32 %v1043, 0.0
          %v1063 = vmax.f32 %v1045, 0.0
          %v1064 = vmax.f32 %v1047, 0.0
          %v1065 = vmax.f32 %v1049, 0.0
          %v1066 = vlaneseq
          %v1067 = vshrl.u32 %v1066, 7
          %v1068 = vadd.s32 %v1067, 8
          %v1069 = vadd.s32 %v1067, 16
          %v1070 = vadd.s32 %v1067, 24
          %v1071 = vadd.s32 %v1067, 32
          %v1072 = vadd.s32 %v1067, 40
          %v1073 = vadd.s32 %v1067, 48
          %v1074 = vadd.s32 %v1067, 56
          %v1075 = vadd.s32 %v1067, 64
          %v1076 = vadd.s32 %v1067, 72
          %v1077 = vadd.s32 %v1067, 80
          %v1078 = vadd.s32 %v1067, 88
          %v1079 = vadd.s32 %v1067, 96
          %v1080 = vadd.s32 %v1067, 104
          %v1081 = vadd.s32 %v1067, 112
          %v1082 = vadd.s32 %v1067, 120
          %s1083 = smul.u32 %s37, 128
          %v1084 = vstv %s1083
          %v1085 = vadd.s32 %v1067, %v1084
          %v1086 = vadd.s32 %v1068, %v1084
          %v1087 = vadd.s32 %v1069, %v1084
          %v1088 = vadd.s32 %v1070, %v1084
          %v1089 = vadd.s32 %v1071, %v1084
          %v1090 = vadd.s32 %v1072, %v1084
          %v1091 = vadd.s32 %v1073, %v1084
          %v1092 = vadd.s32 %v1074, %v1084
          %v1093 = vadd.s32 %v1075, %v1084
          %v1094 = vadd.s32 %v1076, %v1084
          %v1095 = vadd.s32 %v1077, %v1084
          %v1096 = vadd.s32 %v1078, %v1084
          %v1097 = vadd.s32 %v1079, %v1084
          %v1098 = vadd.s32 %v1080, %v1084
          %v1099 = vadd.s32 %v1081, %v1084
          %v1100 = vadd.s32 %v1082, %v1084
          %vm1101 = vcmp.lt.s32.totalorder %v1085, 64
          %vm1102 = vcmp.lt.s32.totalorder %v1086, 64
          %vm1103 = vcmp.lt.s32.totalorder %v1087, 64
          %vm1104 = vcmp.lt.s32.totalorder %v1088, 64
          %vm1105 = vcmp.lt.s32.totalorder %v1089, 64
          %vm1106 = vcmp.lt.s32.totalorder %v1090, 64
          %vm1107 = vcmp.lt.s32.totalorder %v1091, 64
          %vm1108 = vcmp.lt.s32.totalorder %v1092, 64
          %vm1109 = vcmp.lt.s32.totalorder %v1093, 64
          %vm1110 = vcmp.lt.s32.totalorder %v1094, 64
          %vm1111 = vcmp.lt.s32.totalorder %v1095, 64
          %vm1112 = vcmp.lt.s32.totalorder %v1096, 64
          %vm1113 = vcmp.lt.s32.totalorder %v1097, 64
          %vm1114 = vcmp.lt.s32.totalorder %v1098, 64
          %vm1115 = vcmp.lt.s32.totalorder %v1099, 64
          %vm1116 = vcmp.lt.s32.totalorder %v1100, 64
          %v1117 = vsel %vm1101, %v1050, 0.0
          %v1118 = vsel %vm1102, %v1051, 0.0
          %v1119 = vsel %vm1103, %v1052, 0.0
          %v1120 = vsel %vm1104, %v1053, 0.0
          %v1121 = vsel %vm1105, %v1054, 0.0
          %v1122 = vsel %vm1106, %v1055, 0.0
          %v1123 = vsel %vm1107, %v1056, 0.0
          %v1124 = vsel %vm1108, %v1057, 0.0
          %v1125 = vsel %vm1109, %v1058, 0.0
          %v1126 = vsel %vm1110, %v1059, 0.0
          %v1127 = vsel %vm1111, %v1060, 0.0
          %v1128 = vsel %vm1112, %v1061, 0.0
          %v1129 = vsel %vm1113, %v1062, 0.0
          %v1130 = vsel %vm1114, %v1063, 0.0
          %v1131 = vsel %vm1115, %v1064, 0.0
          %v1132 = vsel %vm1116, %v1065, 0.0
          %v1133 = vld [vmem:[%s404] sm:$0x1]
          %vm1134 = vcmask 7168
          %v1135 = vsel %vm1134, %v1117, 0.0
          %v1136 = vsel %vm1134, %v1118, 0.0
          %v1137 = vadd.f32 %v1135, %v1136
          %v1138 = vsel %vm1134, %v1119, 0.0
          %v1139 = vadd.f32 %v1137, %v1138
          %v1140 = vsel %vm1134, %v1120, 0.0
          %v1141 = vadd.f32 %v1139, %v1140
          %v1142 = vsel %vm1134, %v1121, 0.0
          %v1143 = vadd.f32 %v1141, %v1142
          %v1144 = vsel %vm1134, %v1122, 0.0
          %v1145 = vadd.f32 %v1143, %v1144
          %v1146 = vsel %vm1134, %v1123, 0.0
          %v1147 = vadd.f32 %v1145, %v1146
          %v1148 = vsel %vm1134, %v1124, 0.0
          %v1149 = vadd.f32 %v1147, %v1148
          %v1150 = vsel %vm1134, %v1125, 0.0
          %v1151 = vadd.f32 %v1149, %v1150
          %v1152 = vsel %vm1134, %v1126, 0.0
          %v1153 = vadd.f32 %v1151, %v1152
          %v1154 = vsel %vm1134, %v1127, 0.0
          %v1155 = vadd.f32 %v1153, %v1154
          %v1156 = vsel %vm1134, %v1128, 0.0
          %v1157 = vadd.f32 %v1155, %v1156
          %v1158 = vsel %vm1134, %v1129, 0.0
          %v1159 = vadd.f32 %v1157, %v1158
          %v1160 = vsel %vm1134, %v1130, 0.0
          %v1161 = vadd.f32 %v1159, %v1160
          %v1162 = vsel %vm1134, %v1131, 0.0
          %v1163 = vadd.f32 %v1161, %v1162
          %v1164 = vsel %vm1134, %v1132, 0.0
          %v1165 = vadd.f32 %v1163, %v1164
          %1166 = vadd.xlane.f32.xlu0 %v1165
          %v1167 = vpop.xlane.xlu0 %1166
          %v1168 = vrot.slane %v1167, 4
          %v1169 = vadd.f32 %v1167, %v1168
          %v1170 = vrot.slane %v1169, 2
          %v1171 = vadd.f32 %v1169, %v1170
          %v1172 = vrot.slane %v1171, 1
          %v1173 = vadd.f32 %v1171, %v1172
          %s1174 = vtos %v1173
          %v1175 = vstv %s1174
          %v1176 = vadd.f32 %v1133, %v1175
          %1177 = vst [vmem:[%s404] sm:$0x1] %v1176
        $region80: #{tpu_custom_call.1} parent=47 // pred_fallthru
          _
        // Predicated region
        $region81: #{tpu_custom_call.1} parent=47 // pred_check
          %p1178 = pneg %p439
        $region82: #{tpu_custom_call.1} parent=47 // pred_check_branch
          %1180 = sbr.rel (%p1178) target = $region84
        $region83: #{tpu_custom_call.1} parent=47 // pred_region
          %s1181 = scalar_lea.vmem [#allocation5], %s839
          %v1182 = vld [vmem:[%s1181] sm:$0x1]
          %v1183 = vmax.f32 %v1182, 0.0
          %v1184 = vlaneseq
          %v1185 = vand.u32 %v1184, 127
          %v1186 = vstv %s656
          %v1187 = vadd.s32 %v1185, %v1186
          %vm1188 = vcmp.lt.s32.totalorder %v1187, 64
          %v1189 = vsel %vm1188, %v1183, 0.0
          %v1190 = vld [vmem:[%s410] sm:$0x1]
          %vm1191 = vcmask 1040384
          %v1192 = vsel %vm1191, %v1189, 0.0
          %1193 = vadd.xlane.f32.xlu0 %v1192
          %v1194 = vpop.xlane.xlu0 %1193
          %v1195 = vrot.slane %v1194, 4
          %v1196 = vadd.f32 %v1194, %v1195
          %v1197 = vrot.slane %v1196, 2
          %v1198 = vadd.f32 %v1196, %v1197
          %v1199 = vrot.slane %v1198, 1
          %v1200 = vadd.f32 %v1198, %v1199
          %s1201 = vtos %v1200
          %v1202 = vstv %s1201
          %v1203 = vadd.f32 %v1190, %v1202
          %1204 = vst [vmem:[%s410] sm:$0x1] %v1203
        $region84: #{tpu_custom_call.1} parent=47 // pred_fallthru
          _
        %s1205 = sand.u32 %s219, 1
        %s1206 = scalar_lea.sflag [#allocation7], %s1205
        %s1207 = sand.u32 %s219, 1
        %s1208 = scalar_lea.vmem [#allocation6], %s1207
        %s1209 = sand.u32 %s31, 1
        %s1210 = scalar_lea.sflag [#allocation9], %s1209
        %s1211 = sand.u32 %s245, 1
        %s1212 = scalar_lea.vmem [#allocation8], %s1211
        %s1213 = sand.u32 %s31, 1
        %s1214 = scalar_lea.sflag [#allocation9], %s1213
        %s1215 = sand.u32 %s271, 1
        %s1216 = scalar_lea.vmem [#allocation10], %s1215
        %s1217 = sand.u32 %s297, 1
        %s1218 = scalar_lea.sflag [#allocation12], %s1217
        %s1219 = sand.u32 %s297, 1
        %s1220 = scalar_lea.vmem [#allocation11], %s1219
        // Predicated region
        $region85: #{tpu_custom_call.1} parent=47 // pred_check
          %p1221 = pneg %p229
        $region86: #{tpu_custom_call.1} parent=47 // pred_check_branch
          %1223 = sbr.rel (%p1221) target = $region88
        $region87: #{tpu_custom_call.1} parent=47 // pred_region
          %1225 = vsyncadd %s1206, 0
          %s1226 = scalar_lea.hbm %s7, %s36
          %s1228 = sshll.u32 %s1208, 4
          %s1229 = int_to_ptr.vmem [resolvable:$true] %s1228
          %s1230 = sshll.u32 %s1226, 4
          %s1231 = int_to_ptr.hbm [resolvable:$true] %s1230
          %1233 = dma.vmem_to_hbm [thread:$0]  %s1229, 16, %s1231, %s1206
        $region88: #{tpu_custom_call.1} parent=47 // pred_fallthru
          _
        // Predicated region
        $region89: #{tpu_custom_call.1} parent=47 // pred_check
          %p1234 = pneg %p255
        $region90: #{tpu_custom_call.1} parent=47 // pred_check_branch
          %1236 = sbr.rel (%p1234) target = $region92
        $region91: #{tpu_custom_call.1} parent=47 // pred_region
          %1238 = vsyncadd %s1210, 0
          %s1239 = scalar_lea.hbm %s8, %s36
          %s1241 = sshll.u32 %s1212, 4
          %s1242 = int_to_ptr.vmem [resolvable:$true] %s1241
          %s1243 = sshll.u32 %s1239, 4
          %s1244 = int_to_ptr.hbm [resolvable:$true] %s1243
          %1246 = dma.vmem_to_hbm [thread:$0]  %s1242, 16, %s1244, %s1210
        $region92: #{tpu_custom_call.1} parent=47 // pred_fallthru
          _
        // Predicated region
        $region93: #{tpu_custom_call.1} parent=47 // pred_check
          %p1247 = pneg %p281
        $region94: #{tpu_custom_call.1} parent=47 // pred_check_branch
          %1249 = sbr.rel (%p1247) target = $region96
        $region95: #{tpu_custom_call.1} parent=47 // pred_region
          %1251 = vsyncadd %s1214, 0
          %s1252 = scalar_lea.hbm %s9, %s36
          %s1254 = sshll.u32 %s1216, 4
          %s1255 = int_to_ptr.vmem [resolvable:$true] %s1254
          %s1256 = sshll.u32 %s1252, 4
          %s1257 = int_to_ptr.hbm [resolvable:$true] %s1256
          %1259 = dma.vmem_to_hbm [thread:$0]  %s1255, 16, %s1257, %s1214
        $region96: #{tpu_custom_call.1} parent=47 // pred_fallthru
          _
        // Predicated region
        $region97: #{tpu_custom_call.1} parent=47 // pred_check
          %p1260 = pneg %p307
        $region98: #{tpu_custom_call.1} parent=47 // pred_check_branch
          %1262 = sbr.rel (%p1260) target = $region100
        $region99: #{tpu_custom_call.1} parent=47 // pred_region
          %1264 = vsyncadd %s1218, 0
          %s1265 = scalar_lea.hbm %s10, %s36
          %s1267 = sshll.u32 %s1220, 4
          %s1268 = int_to_ptr.vmem [resolvable:$true] %s1267
          %s1269 = sshll.u32 %s1265, 4
          %s1270 = int_to_ptr.hbm [resolvable:$true] %s1269
          %1272 = dma.vmem_to_hbm [thread:$0]  %s1268, 16, %s1270, %s1218
        $region100: #{tpu_custom_call.1} parent=47 // pred_fallthru
          _
      $region48: #{tpu_custom_call.1} parent=5 // pred_fallthru
        _
      %p1273 = scmp.le.s32.totalorder 2, %s26
      // Predicated region
      $region101: #{tpu_custom_call.1} parent=5 // pred_check
        %p1274 = pneg %p1273
      $region102: #{tpu_custom_call.1} parent=5 // pred_check_branch
        %1276 = sbr.rel (%p1274) target = $region104
      $region103: #{tpu_custom_call.1} parent=5 // pred_region
        %s1277 = ssub.s32 %s26, 2
        // Predicated region
        $region105: #{tpu_custom_call.1} parent=103 // pred_check
          %p1278 = pneg %p235
        $region106: #{tpu_custom_call.1} parent=103 // pred_check_branch
          %1280 = sbr.rel (%p1278) target = $region108
        $region107: #{tpu_custom_call.1} parent=103 // pred_region
          %s1281 = sand.u32 %s220, 1
          %s1282 = scalar_lea.sflag [#allocation7], %s1281
          %s1283 = sand.u32 %s220, 1
          %s1284 = scalar_lea.vmem [#allocation6], %s1283
          %1286 = dma.done %s1282, 16
        $region108: #{tpu_custom_call.1} parent=103 // pred_fallthru
          _
        // Predicated region
        $region109: #{tpu_custom_call.1} parent=103 // pred_check
          %p1287 = pneg %p261
        $region110: #{tpu_custom_call.1} parent=103 // pred_check_branch
          %1289 = sbr.rel (%p1287) target = $region112
        $region111: #{tpu_custom_call.1} parent=103 // pred_region
          %s1290 = sand.u32 %s32, 1
          %s1291 = scalar_lea.sflag [#allocation9], %s1290
          %s1292 = sand.u32 %s246, 1
          %s1293 = scalar_lea.vmem [#allocation8], %s1292
          %1295 = dma.done %s1291, 16
        $region112: #{tpu_custom_call.1} parent=103 // pred_fallthru
          _
        // Predicated region
        $region113: #{tpu_custom_call.1} parent=103 // pred_check
          %p1296 = pneg %p287
        $region114: #{tpu_custom_call.1} parent=103 // pred_check_branch
          %1298 = sbr.rel (%p1296) target = $region116
        $region115: #{tpu_custom_call.1} parent=103 // pred_region
          %s1299 = sand.u32 %s32, 1
          %s1300 = scalar_lea.sflag [#allocation9], %s1299
          %s1301 = sand.u32 %s272, 1
          %s1302 = scalar_lea.vmem [#allocation10], %s1301
          %1304 = dma.done %s1300, 16
        $region116: #{tpu_custom_call.1} parent=103 // pred_fallthru
          _
        // Predicated region
        $region117: #{tpu_custom_call.1} parent=103 // pred_check
          %p1305 = pneg %p313
        $region118: #{tpu_custom_call.1} parent=103 // pred_check_branch
          %1307 = sbr.rel (%p1305) target = $region120
        $region119: #{tpu_custom_call.1} parent=103 // pred_region
          %s1308 = sand.u32 %s298, 1
          %s1309 = scalar_lea.sflag [#allocation12], %s1308
          %s1310 = sand.u32 %s298, 1
          %s1311 = scalar_lea.vmem [#allocation11], %s1310
          %1313 = dma.done %s1309, 16
        $region120: #{tpu_custom_call.1} parent=103 // pred_fallthru
          _
      $region104: #{tpu_custom_call.1} parent=5 // pred_fallthru
        _
    $region6: #{tpu_custom_call.1} parent=1 // loop_footer
      %s30 = sadd.s32 1, %s26
    $region7: #{tpu_custom_call.1} parent=1 // loop_footer_branch
      %25 = sbr.rel target = $region3
    $region8: #{tpu_custom_call.1} parent=1 // loop_exit
      _
    %1314 = vsyncpa [#allocation7], 1
    %s1315 = scalar_lea.sflag [#allocation7], 1
    %1316 = vsyncpa %s1315, 1
    %1317 = vsyncpa [#allocation9], 1
    %s1318 = scalar_lea.sflag [#allocation9], 1
    %1319 = vsyncpa %s1318, 1
    %1320 = vsyncpa [#allocation12], 1
    %s1321 = scalar_lea.sflag [#allocation12], 1
    %1322 = vsyncpa %s1321, 1

</llo_original>
